<compile_context>
chip_gen: v7x
topology: tpu7x:2x2x1
jax: 0.10.0
libtpu: 0.0.40
codegen_flags: <defaults>
</compile_context>

<pallas_src>
import functools

import numpy as np

import jax
import jax.numpy as jnp
from jax.experimental import pallas as pl
from jax.experimental.pallas import tpu as pltpu


def _round_up(x, m):
    return ((x + m - 1) // m) * m


def _vmem_capacity_bytes():
    try:
        return int(pltpu.get_tpu_info().vmem_capacity_bytes)
    except Exception:
        return 64 * 1024 * 1024        # conservative default (v7x per-core VMEM)


# ------------------------------- Pallas kernel ------------------------------ #

def _conv_bn_prelu_kernel(x_ref, wb_ref, fold_ref, bcast_ref,
                          gamma_ref, beta_ref, alpha_ref,
                          o_ref,
                          y_buf, sum_acc, ssq_acc, scale_ref, shift_ref,
                          *, kh, sh, oh, eps, inv_count):
    """Grid = (2, N): axis 0 = pass (0: conv + stat accumulation, 1: stats
    finalize + BN/PReLU epilogue), axis 1 = image.  Both axes are sequential
    because pass 1 depends on the resident buffer / accumulators pass 0 fills.
    """
    p = pl.program_id(0)
    n = pl.program_id(1)

    # ---- (0, 0): zero the batch-statistics accumulators ----
    @pl.when(jnp.logical_and(p == 0, n == 0))
    def _init():
        sum_acc[...] = jnp.zeros_like(sum_acc)
        ssq_acc[...] = jnp.zeros_like(ssq_acc)

    # ---- pass 0: banded-matmul convolution for image n (kept resident) ----
    @pl.when(p == 0)
    def _conv():
        acc = None
        for di in range(kh):
            if sh == 1:
                lhs = x_ref[0, di:di + oh, :]                 # (OH, Wp*C_in)
            else:
                # TODO(synk): stride>1 uses a sublane-strided value slice; it is
                # functional but unexercised here (prefer a pre-strided layout
                # if this path ever becomes hot).
                lhs = x_ref[0][di:di + (oh - 1) * sh + 1:sh, :]
            contrib = jnp.dot(lhs, wb_ref[di],
                              preferred_element_type=jnp.float32)
            acc = contrib if acc is None else acc + contrib   # (OH, OW*C_out)
        y_buf[n] = acc
        # Per-(ow, c) partial sums for the batch statistics -- accumulated here
        # (hides under the MXU) so pass 1 never re-reads the resident buffer.
        sum_acc[...] += jnp.sum(acc, axis=0, keepdims=True)
        ssq_acc[...] += jnp.sum(acc * acc, axis=0, keepdims=True)

    # ---- (1, 0): finalize batch stats -> folded BN scale / shift ----
    @pl.when(jnp.logical_and(p == 1, n == 0))
    def _stats():
        # Fold per-(ow, c) lane positions to per-channel totals and broadcast
        # them back across the ow groups with two tiny MXU matvecs (0/1
        # matrices) -- no cross-lane reshapes.
        chan_sum = jnp.dot(sum_acc[...], fold_ref[...],
                           preferred_element_type=jnp.float32)    # (1, C_out)
        chan_ssq = jnp.dot(ssq_acc[...], fold_ref[...],
                           preferred_element_type=jnp.float32)
        mean_t = jnp.dot(chan_sum, bcast_ref[...],
                         preferred_element_type=jnp.float32) * inv_count
        ex2_t = jnp.dot(chan_ssq, bcast_ref[...],
                        preferred_element_type=jnp.float32) * inv_count
        # Biased (train-mode) variance from f32 accumulators.  For very large
        # activations switch to a two-pass / compensated reduction instead.
        var_t = jnp.maximum(ex2_t - mean_t * mean_t, 0.0)
        inv_std = jax.lax.rsqrt(var_t + eps)
        g = gamma_ref[...]
        scale_ref[...] = g * inv_std
        shift_ref[...] = beta_ref[...] - mean_t * g * inv_std

    # ---- pass 1: BN affine + PReLU, lane-dense store of the final output ----
    @pl.when(p == 1)
    def _epilogue():
        z = y_buf[n] * scale_ref[...] + shift_ref[...]
        o_ref[0] = jnp.where(z >= 0.0, z, alpha_ref[...] * z).astype(o_ref.dtype)


# ------------------------------ glue / wrapper ------------------------------ #

@functools.partial(jax.jit, static_argnames=("kernel", "stride", "padding"))
def conv_block_forward(x_nchw, w, gamma, beta, alpha,
                       kernel=(1, 1), stride=(1, 1), padding=(0, 0)):
    """Forward pass of Conv_block.  x is NCHW (PyTorch convention)."""
    eps = 1e-5
    kh, kw = kernel
    sh, sw = stride
    ph, pw = padding

    N, C_in, H, W = x_nchw.shape
    C_out = w.shape[0]
    Hp, Wp = H + 2 * ph, W + 2 * pw
    OH = (Hp - kh) // sh + 1
    OW = (Wp - kw) // sw + 1
    WC = Wp * C_in               # lane-dense packed input width
    OWC = OW * C_out             # lane-dense output width (no 128 channel pad)
    inv_count = 1.0 / float(N * OH * OW)

    # ---- glue: lane-dense packed input (N, Hp, Wp*C_in), bf16 operands ----
    x_nhwc = jnp.transpose(x_nchw, (0, 2, 3, 1))
    x_pad = jnp.pad(x_nhwc, ((0, 0), (ph, ph), (pw, pw), (0, 0)))
    x_pack = x_pad.reshape(N, Hp, WC).astype(jnp.bfloat16)

    # ---- glue: banded weight matrices, one per kernel row ----
    # w_band[di, wj*C_in + c, ow*C_out + co] = w[co, c, di, wj - ow*sw]
    # (zero outside the band), so conv = sum_di  x_rows(di) @ w_band[di].
    w_rows = jnp.transpose(w, (2, 3, 1, 0)).reshape(kh, kw * C_in, C_out)
    ow_i = np.arange(OW)
    kc_i = np.arange(kw * C_in)
    co_i = np.arange(C_out)
    rows = ow_i[:, None, None] * (sw * C_in) + kc_i[None, :, None]
    cols = ow_i[:, None, None] * C_out + co_i[None, None, :]
    rows, cols = np.broadcast_arrays(rows, cols)         # (OW, kw*C_in, C_out)
    w_band = jnp.zeros((kh, WC, OWC), jnp.float32)
    w_band = w_band.at[:, rows, cols].set(
        jnp.broadcast_to(w_rows[:, None, :, :], (kh, OW, kw * C_in, C_out)))
    w_band = w_band.astype(jnp.bfloat16)

    # ---- glue: 0/1 fold / broadcast matrices for per-channel statistics ----
    eye = jnp.eye(C_out, dtype=jnp.float32)
    fold = jnp.tile(eye, (OW, 1))           # (OW*C_out, C_out): sum over ow
    bcast = jnp.tile(eye, (1, OW))          # (C_out, OW*C_out): broadcast back

    def _tile_vec(v):                        # per-channel vec -> (1, OW*C_out)
        return jnp.tile(v.astype(jnp.float32), OW).reshape(1, OWC)

    gamma_t, beta_t, alpha_t = _tile_vec(gamma), _tile_vec(beta), _tile_vec(alpha)

    # ---- layout-aware VMEM budget, clamped to the physical capacity ----
    lane = 128
    x_blk = 2 * _round_up(Hp, 16) * _round_up(WC, lane) * 2          # bf16, 2 bufs
    wb_blk = 2 * kh * _round_up(WC, 16) * _round_up(OWC, lane) * 2   # bf16, 2 bufs
    fold_blk = 2 * (_round_up(OWC, 8) * _round_up(C_out, lane)
                    + _round_up(C_out, 8) * _round_up(OWC, lane)) * 4
    vec_blk = 3 * 2 * 8 * _round_up(OWC, lane) * 4
    out_blk = 2 * _round_up(OH, 8) * _round_up(OWC, lane) * 4
    ybuf_b = N * _round_up(OH, 8) * _round_up(OWC, lane) * 4         # resident buf
    small = 4 * 8 * _round_up(OWC, lane) * 4
    vmem_need = x_blk + wb_blk + fold_blk + vec_blk + out_blk + ybuf_b + small
    vmem_limit = int(min(max(2 * vmem_need, 16 << 20),
                         _vmem_capacity_bytes() - (2 << 20)))

    kern = functools.partial(_conv_bn_prelu_kernel,
                             kh=kh, sh=sh, oh=OH, eps=eps, inv_count=inv_count)

    out = pl.pallas_call(
        kern,
        out_shape=jax.ShapeDtypeStruct((N, OH, OWC), jnp.float32),
        grid_spec=pltpu.PrefetchScalarGridSpec(
            num_scalar_prefetch=0,
            grid=(2, N),                      # (pass, image); image innermost
            in_specs=[
                # n*(1-p): pass 1 never reads x, so its block index stays
                # constant there and every image is DMA'd exactly once.
                pl.BlockSpec((1, Hp, WC), lambda p, n: (n * (1 - p), 0, 0)),
                pl.BlockSpec((kh, WC, OWC), lambda p, n: (0, 0, 0)),
                pl.BlockSpec((OWC, C_out), lambda p, n: (0, 0)),
                pl.BlockSpec((C_out, OWC), lambda p, n: (0, 0)),
                pl.BlockSpec((1, OWC), lambda p, n: (0, 0)),
                pl.BlockSpec((1, OWC), lambda p, n: (0, 0)),
                pl.BlockSpec((1, OWC), lambda p, n: (0, 0)),
            ],
            # p*n: the output block index stays at 0 during pass 0, so nothing
            # is written back before pass 1 has produced valid data.
            out_specs=pl.BlockSpec((1, OH, OWC), lambda p, n: (p * n, 0, 0)),
            scratch_shapes=[
                pltpu.VMEM((N, OH, OWC), jnp.float32),   # resident conv output
                pltpu.VMEM((1, OWC), jnp.float32),       # per-(ow,c) sum
                pltpu.VMEM((1, OWC), jnp.float32),       # per-(ow,c) sum of sq
                pltpu.VMEM((1, OWC), jnp.float32),       # BN scale (tiled)
                pltpu.VMEM((1, OWC), jnp.float32),       # BN shift (tiled)
            ],
        ),
        compiler_params=pltpu.CompilerParams(
            # Sequential: pass 1 depends on the state pass 0 fills.
            # TODO(synk): v7x 2-TC split of the image axis with per-core
            # partial stats belongs in the tiled-stats variant.
            dimension_semantics=("arbitrary", "arbitrary"),
            vmem_limit_bytes=vmem_limit,
        ),
    )(x_pack, w_band, fold, bcast, gamma_t, beta_t, alpha_t)

    # ---- glue: NHWC (already lane-dense, no channel padding) -> NCHW ----
    out = out.reshape(N, OH, OW, C_out)
    return jnp.transpose(out, (0, 3, 1, 2))


# ----------------------------- pure-JAX reference --------------------------- #

def _reference(x_nchw, w, gamma, beta, alpha, stride, padding):
    """f32 reference; operands pre-rounded to bf16 to match the kernel's MXU dtype."""
    eps = 1e-5
    bf = lambda a: a.astype(jnp.bfloat16).astype(jnp.float32)
    y = jax.lax.conv_general_dilated(
        bf(x_nchw), bf(w), window_strides=stride,
        padding=[(padding[0], padding[0]), (padding[1], padding[1])],
        dimension_numbers=("NCHW", "OIHW", "NCHW"),
        precision=jax.lax.Precision.HIGHEST)
    mean = jnp.mean(y, axis=(0, 2, 3), keepdims=True)
    var = jnp.mean((y - mean) ** 2, axis=(0, 2, 3), keepdims=True)
    z = (y - mean) * jax.lax.rsqrt(var + eps)
    z = z * gamma[None, :, None, None] + beta[None, :, None, None]
    return jnp.where(z >= 0.0, z, alpha[None, :, None, None] * z)


# ----------------------------------- main ----------------------------------- #

if __name__ == "__main__":
    key = jax.random.PRNGKey(0)
    k_x, k_w, k_g, k_b, k_a = jax.random.split(key, 5)

    N, in_c, H, W = 2, 4, 16, 16
    out_c = 8

    x = jax.random.normal(k_x, (N, in_c, H, W), dtype=jnp.float32)
    gamma = 1.0 + 0.1 * jax.random.normal(k_g, (out_c,), dtype=jnp.float32)
    beta = 0.1 * jax.random.normal(k_b, (out_c,), dtype=jnp.float32)
    alpha = jnp.full((out_c,), 0.25, dtype=jnp.float32)   # PyTorch PReLU init

    # --- config 1: module defaults (1x1, stride 1, no padding): one dot/image ---
    kernel, stride, padding = (1, 1), (1, 1), (0, 0)
    w1 = jax.random.normal(k_w, (out_c, in_c, *kernel), dtype=jnp.float32) * 0.1
    out1 = conv_block_forward(x, w1, gamma, beta, alpha,
                              kernel=kernel, stride=stride, padding=padding)
    out1 = jax.block_until_ready(out1)
    ref1 = _reference(x, w1, gamma, beta, alpha, stride, padding)
    assert out1.shape == ref1.shape
    err1 = float(jnp.max(jnp.abs(out1 - ref1)))
    assert err1 < 1e-3, f"mismatch (1x1 config): {err1}"

    # --- config 2: 3x3, stride 1, padding 1: banded (kw, C_in) contraction ---
    kernel, stride, padding = (3, 3), (1, 1), (1, 1)
    w3 = jax.random.normal(k_w, (out_c, in_c, *kernel), dtype=jnp.float32) * 0.1
    out3 = conv_block_forward(x, w3, gamma, beta, alpha,
                              kernel=kernel, stride=stride, padding=padding)
    out3 = jax.block_until_ready(out3)
    ref3 = _reference(x, w3, gamma, beta, alpha, stride, padding)
    assert out3.shape == ref3.shape
    err3 = float(jnp.max(jnp.abs(out3 - ref3)))
    assert err3 < 1e-3, f"mismatch (3x3 config): {err3}"

    print("KERNEL_OK")
</pallas_src>

<mosaic_0001>
module attributes {stable_mosaic.version = 11 : i64} {
  func.func @_conv_bn_prelu_kernel(%arg0: i32, %arg1: i32, %arg2: memref<1x16x64xbf16, #tpu.memory_space<vmem>>, %arg3: memref<1x64x128xbf16, #tpu.memory_space<vmem>>, %arg4: memref<128x8xf32, #tpu.memory_space<vmem>>, %arg5: memref<8x128xf32, #tpu.memory_space<vmem>>, %arg6: memref<1x128xf32, #tpu.memory_space<vmem>>, %arg7: memref<1x128xf32, #tpu.memory_space<vmem>>, %arg8: memref<1x128xf32, #tpu.memory_space<vmem>>, %arg9: memref<1x16x128xf32, #tpu.memory_space<vmem>>, %arg10: memref<2x16x128xf32, #tpu.memory_space<vmem>>, %arg11: memref<1x128xf32, #tpu.memory_space<vmem>>, %arg12: memref<1x128xf32, #tpu.memory_space<vmem>>, %arg13: memref<1x128xf32, #tpu.memory_space<vmem>>, %arg14: memref<1x128xf32, #tpu.memory_space<vmem>>) attributes {dimension_semantics = [#tpu.dimension_semantics<arbitrary>, #tpu.dimension_semantics<arbitrary>], iteration_bounds = array<i64: 2, 2>, scalar_prefetch = 0 : i64, scratch_operands = 5 : i64, tpu.core_type = #tpu.core_type<tc>, window_params = [{transform_indices = @transform_0, window_bounds = array<i64: 1, 16, 64>}, {pipeline_mode = #tpu.pipeline_mode<synchronous>, transform_indices = @transform_1, window_bounds = array<i64: 1, 64, 128>}, {pipeline_mode = #tpu.pipeline_mode<synchronous>, transform_indices = @transform_2, window_bounds = array<i64: 128, 8>}, {pipeline_mode = #tpu.pipeline_mode<synchronous>, transform_indices = @transform_3, window_bounds = array<i64: 8, 128>}, {pipeline_mode = #tpu.pipeline_mode<synchronous>, transform_indices = @transform_4, window_bounds = array<i64: 1, 128>}, {pipeline_mode = #tpu.pipeline_mode<synchronous>, transform_indices = @transform_5, window_bounds = array<i64: 1, 128>}, {pipeline_mode = #tpu.pipeline_mode<synchronous>, transform_indices = @transform_6, window_bounds = array<i64: 1, 128>}, {transform_indices = @transform_7, window_bounds = array<i64: 1, 16, 128>}]} {
    %c0_i32 = arith.constant 0 : i32
    %0 = arith.cmpi eq, %arg0, %c0_i32 : i32
    %c0_i32_0 = arith.constant 0 : i32
    %1 = arith.cmpi eq, %arg1, %c0_i32_0 : i32
    %2 = arith.andi %0, %1 : i1
    %3 = arith.extui %2 : i1 to i32
    %c0_i32_1 = arith.constant 0 : i32
    %4 = arith.cmpi ne, %3, %c0_i32_1 : i32
    scf.if %4 {
      %cst = arith.constant 0.000000e+00 : f32
      %16 = vector.broadcast %cst : f32 to vector<1x128xf32>
      %c0 = arith.constant 0 : index
      %c0_8 = arith.constant 0 : index
      %17 = vector.load %arg11[%c0, %c0_8] : memref<1x128xf32, #tpu.memory_space<vmem>>, vector<1x128xf32>
      tpu.vector_store %arg11[%c0, %c0_8], %16 {strides = array<i32>} : memref<1x128xf32, #tpu.memory_space<vmem>>, vector<1x128xf32>,
      %cst_9 = arith.constant 0.000000e+00 : f32
      %18 = vector.broadcast %cst_9 : f32 to vector<1x128xf32>
      %c0_10 = arith.constant 0 : index
      %c0_11 = arith.constant 0 : index
      %19 = vector.load %arg12[%c0_10, %c0_11] : memref<1x128xf32, #tpu.memory_space<vmem>>, vector<1x128xf32>
      tpu.vector_store %arg12[%c0_10, %c0_11], %18 {strides = array<i32>} : memref<1x128xf32, #tpu.memory_space<vmem>>, vector<1x128xf32>,
    } else {
    }
    %c0_i32_2 = arith.constant 0 : i32
    %5 = arith.cmpi eq, %arg0, %c0_i32_2 : i32
    %6 = arith.extui %5 : i1 to i32
    %c0_i32_3 = arith.constant 0 : i32
    %7 = arith.cmpi ne, %6, %c0_i32_3 : i32
    scf.if %7 {
      %c0 = arith.constant 0 : index
      %c0_8 = arith.constant 0 : index
      %c0_9 = arith.constant 0 : index
      %16 = vector.load %arg2[%c0, %c0_8, %c0_9] : memref<1x16x64xbf16, #tpu.memory_space<vmem>>, vector<1x16x64xbf16>
      %17 = vector.shape_cast %16 : vector<1x16x64xbf16> to vector<16x64xbf16>
      %c0_10 = arith.constant 0 : index
      %c0_11 = arith.constant 0 : index
      %c0_12 = arith.constant 0 : index
      %18 = vector.load %arg3[%c0_10, %c0_11, %c0_12] : memref<1x64x128xbf16, #tpu.memory_space<vmem>>, vector<1x64x128xbf16>
      %19 = vector.shape_cast %18 : vector<1x64x128xbf16> to vector<64x128xbf16>
      %cst = arith.constant dense<0.000000e+00> : vector<16x128xf32>
      %20 = tpu.matmul %17, %19, %cst {dimension_numbers = #tpu.dot_dimension_numbers<[1], [0], [0], [1], [0, 0, 1, 1], [], []>} : vector<16x64xbf16>, vector<64x128xbf16>, vector<16x128xf32> -> vector<16x128xf32>
      %21 = arith.index_cast %arg1 : i32 to index
      %c0_13 = arith.constant 0 : index
      %c0_14 = arith.constant 0 : index
      %22 = vector.load %arg10[%21, %c0_13, %c0_14] : memref<2x16x128xf32, #tpu.memory_space<vmem>>, vector<1x16x128xf32>
      %23 = vector.shape_cast %22 : vector<1x16x128xf32> to vector<16x128xf32>
      %24 = vector.shape_cast %20 : vector<16x128xf32> to vector<1x16x128xf32>
      tpu.vector_store %arg10[%21, %c0_13, %c0_14], %24 {strides = array<i32>} : memref<2x16x128xf32, #tpu.memory_space<vmem>>, vector<1x16x128xf32>,
      %c0_15 = arith.constant 0 : index
      %c0_16 = arith.constant 0 : index
      %25 = vector.load %arg11[%c0_15, %c0_16] : memref<1x128xf32, #tpu.memory_space<vmem>>, vector<1x128xf32>
      %cst_17 = arith.constant dense<0.000000e+00> : vector<128xf32>
      %26 = vector.multi_reduction <add>, %20, %cst_17 [0] : vector<16x128xf32> to vector<128xf32>
      %27 = vector.shape_cast %26 : vector<128xf32> to vector<1x128xf32>
      %28 = arith.addf %25, %27 : vector<1x128xf32>
      %c0_18 = arith.constant 0 : index
      %c0_19 = arith.constant 0 : index
      %29 = vector.load %arg11[%c0_18, %c0_19] : memref<1x128xf32, #tpu.memory_space<vmem>>, vector<1x128xf32>
      tpu.vector_store %arg11[%c0_18, %c0_19], %28 {strides = array<i32>} : memref<1x128xf32, #tpu.memory_space<vmem>>, vector<1x128xf32>,
      %c0_20 = arith.constant 0 : index
      %c0_21 = arith.constant 0 : index
      %30 = vector.load %arg12[%c0_20, %c0_21] : memref<1x128xf32, #tpu.memory_space<vmem>>, vector<1x128xf32>
      %31 = arith.mulf %20, %20 : vector<16x128xf32>
      %cst_22 = arith.constant dense<0.000000e+00> : vector<128xf32>
      %32 = vector.multi_reduction <add>, %31, %cst_22 [0] : vector<16x128xf32> to vector<128xf32>
      %33 = vector.shape_cast %32 : vector<128xf32> to vector<1x128xf32>
      %34 = arith.addf %30, %33 : vector<1x128xf32>
      %c0_23 = arith.constant 0 : index
      %c0_24 = arith.constant 0 : index
      %35 = vector.load %arg12[%c0_23, %c0_24] : memref<1x128xf32, #tpu.memory_space<vmem>>, vector<1x128xf32>
      tpu.vector_store %arg12[%c0_23, %c0_24], %34 {strides = array<i32>} : memref<1x128xf32, #tpu.memory_space<vmem>>, vector<1x128xf32>,
    } else {
    }
    %c1_i32 = arith.constant 1 : i32
    %8 = arith.cmpi eq, %arg0, %c1_i32 : i32
    %c0_i32_4 = arith.constant 0 : i32
    %9 = arith.cmpi eq, %arg1, %c0_i32_4 : i32
    %10 = arith.andi %8, %9 : i1
    %11 = arith.extui %10 : i1 to i32
    %c0_i32_5 = arith.constant 0 : i32
    %12 = arith.cmpi ne, %11, %c0_i32_5 : i32
    scf.if %12 {
      %c0 = arith.constant 0 : index
      %c0_8 = arith.constant 0 : index
      %16 = vector.load %arg11[%c0, %c0_8] : memref<1x128xf32, #tpu.memory_space<vmem>>, vector<1x128xf32>
      %c0_9 = arith.constant 0 : index
      %c0_10 = arith.constant 0 : index
      %17 = vector.load %arg4[%c0_9, %c0_10] : memref<128x8xf32, #tpu.memory_space<vmem>>, vector<128x8xf32>
      %cst = arith.constant dense<0.000000e+00> : vector<1x8xf32>
      %18 = tpu.matmul %16, %17, %cst {dimension_numbers = #tpu.dot_dimension_numbers<[1], [0], [0], [1], [0, 0, 1, 1], [], []>} : vector<1x128xf32>, vector<128x8xf32>, vector<1x8xf32> -> vector<1x8xf32>
      %c0_11 = arith.constant 0 : index
      %c0_12 = arith.constant 0 : index
      %19 = vector.load %arg12[%c0_11, %c0_12] : memref<1x128xf32, #tpu.memory_space<vmem>>, vector<1x128xf32>
      %c0_13 = arith.constant 0 : index
      %c0_14 = arith.constant 0 : index
      %20 = vector.load %arg4[%c0_13, %c0_14] : memref<128x8xf32, #tpu.memory_space<vmem>>, vector<128x8xf32>
      %cst_15 = arith.constant dense<0.000000e+00> : vector<1x8xf32>
      %21 = tpu.matmul %19, %20, %cst_15 {dimension_numbers = #tpu.dot_dimension_numbers<[1], [0], [0], [1], [0, 0, 1, 1], [], []>} : vector<1x128xf32>, vector<128x8xf32>, vector<1x8xf32> -> vector<1x8xf32>
      %c0_16 = arith.constant 0 : index
      %c0_17 = arith.constant 0 : index
      %22 = vector.load %arg5[%c0_16, %c0_17] : memref<8x128xf32, #tpu.memory_space<vmem>>, vector<8x128xf32>
      %cst_18 = arith.constant dense<0.000000e+00> : vector<1x128xf32>
      %23 = tpu.matmul %18, %22, %cst_18 {dimension_numbers = #tpu.dot_dimension_numbers<[1], [0], [0], [1], [0, 0, 1, 1], [], []>} : vector<1x8xf32>, vector<8x128xf32>, vector<1x128xf32> -> vector<1x128xf32>
      %cst_19 = arith.constant 0.001953125 : f32
      %24 = vector.broadcast %cst_19 : f32 to vector<1x128xf32>
      %25 = arith.mulf %23, %24 : vector<1x128xf32>
      %c0_20 = arith.constant 0 : index
      %c0_21 = arith.constant 0 : index
      %26 = vector.load %arg5[%c0_20, %c0_21] : memref<8x128xf32, #tpu.memory_space<vmem>>, vector<8x128xf32>
      %cst_22 = arith.constant dense<0.000000e+00> : vector<1x128xf32>
      %27 = tpu.matmul %21, %26, %cst_22 {dimension_numbers = #tpu.dot_dimension_numbers<[1], [0], [0], [1], [0, 0, 1, 1], [], []>} : vector<1x8xf32>, vector<8x128xf32>, vector<1x128xf32> -> vector<1x128xf32>
      %cst_23 = arith.constant 0.001953125 : f32
      %28 = vector.broadcast %cst_23 : f32 to vector<1x128xf32>
      %29 = arith.mulf %27, %28 : vector<1x128xf32>
      %30 = arith.mulf %25, %25 : vector<1x128xf32>
      %31 = arith.subf %29, %30 : vector<1x128xf32>
      %cst_24 = arith.constant 0.000000e+00 : f32
      %32 = vector.broadcast %cst_24 : f32 to vector<1x128xf32>
      %33 = arith.maximumf %31, %32 : vector<1x128xf32>
      %cst_25 = arith.constant 9.99999974E-6 : f32
      %34 = vector.broadcast %cst_25 : f32 to vector<1x128xf32>
      %35 = arith.addf %33, %34 : vector<1x128xf32>
      %36 = math.rsqrt %35 : vector<1x128xf32>
      %c0_26 = arith.constant 0 : index
      %c0_27 = arith.constant 0 : index
      %37 = vector.load %arg6[%c0_26, %c0_27] : memref<1x128xf32, #tpu.memory_space<vmem>>, vector<1x128xf32>
      %38 = arith.mulf %37, %36 : vector<1x128xf32>
      %c0_28 = arith.constant 0 : index
      %c0_29 = arith.constant 0 : index
      %39 = vector.load %arg13[%c0_28, %c0_29] : memref<1x128xf32, #tpu.memory_space<vmem>>, vector<1x128xf32>
      tpu.vector_store %arg13[%c0_28, %c0_29], %38 {strides = array<i32>} : memref<1x128xf32, #tpu.memory_space<vmem>>, vector<1x128xf32>,
      %c0_30 = arith.constant 0 : index
      %c0_31 = arith.constant 0 : index
      %40 = vector.load %arg7[%c0_30, %c0_31] : memref<1x128xf32, #tpu.memory_space<vmem>>, vector<1x128xf32>
      %41 = arith.mulf %25, %37 : vector<1x128xf32>
      %42 = arith.mulf %41, %36 : vector<1x128xf32>
      %43 = arith.subf %40, %42 : vector<1x128xf32>
      %c0_32 = arith.constant 0 : index
      %c0_33 = arith.constant 0 : index
      %44 = vector.load %arg14[%c0_32, %c0_33] : memref<1x128xf32, #tpu.memory_space<vmem>>, vector<1x128xf32>
      tpu.vector_store %arg14[%c0_32, %c0_33], %43 {strides = array<i32>} : memref<1x128xf32, #tpu.memory_space<vmem>>, vector<1x128xf32>,
    } else {
    }
    %c1_i32_6 = arith.constant 1 : i32
    %13 = arith.cmpi eq, %arg0, %c1_i32_6 : i32
    %14 = arith.extui %13 : i1 to i32
    %c0_i32_7 = arith.constant 0 : i32
    %15 = arith.cmpi ne, %14, %c0_i32_7 : i32
    scf.if %15 {
      %16 = arith.index_cast %arg1 : i32 to index
      %c0 = arith.constant 0 : index
      %c0_8 = arith.constant 0 : index
      %17 = vector.load %arg10[%16, %c0, %c0_8] : memref<2x16x128xf32, #tpu.memory_space<vmem>>, vector<1x16x128xf32>
      %18 = vector.shape_cast %17 : vector<1x16x128xf32> to vector<16x128xf32>
      %c0_9 = arith.constant 0 : index
      %c0_10 = arith.constant 0 : index
      %19 = vector.load %arg13[%c0_9, %c0_10] : memref<1x128xf32, #tpu.memory_space<vmem>>, vector<1x128xf32>
      %20 = vector.broadcast %19 : vector<1x128xf32> to vector<16x128xf32>
      %21 = arith.mulf %18, %20 : vector<16x128xf32>
      %c0_11 = arith.constant 0 : index
      %c0_12 = arith.constant 0 : index
      %22 = vector.load %arg14[%c0_11, %c0_12] : memref<1x128xf32, #tpu.memory_space<vmem>>, vector<1x128xf32>
      %23 = vector.broadcast %22 : vector<1x128xf32> to vector<16x128xf32>
      %24 = arith.addf %21, %23 : vector<16x128xf32>
      %cst = arith.constant 0.000000e+00 : f32
      %25 = vector.broadcast %cst : f32 to vector<16x128xf32>
      %26 = arith.cmpf oge, %24, %25 : vector<16x128xf32>
      %c0_13 = arith.constant 0 : index
      %c0_14 = arith.constant 0 : index
      %27 = vector.load %arg8[%c0_13, %c0_14] : memref<1x128xf32, #tpu.memory_space<vmem>>, vector<1x128xf32>
      %28 = vector.broadcast %27 : vector<1x128xf32> to vector<16x128xf32>
      %29 = arith.mulf %28, %24 : vector<16x128xf32>
      %30 = arith.select %26, %24, %29 : vector<16x128xi1>, vector<16x128xf32>
      %c0_15 = arith.constant 0 : index
      %c0_16 = arith.constant 0 : index
      %c0_17 = arith.constant 0 : index
      %31 = vector.load %arg9[%c0_15, %c0_16, %c0_17] : memref<1x16x128xf32, #tpu.memory_space<vmem>>, vector<1x16x128xf32>
      %32 = vector.shape_cast %31 : vector<1x16x128xf32> to vector<16x128xf32>
      %33 = vector.shape_cast %30 : vector<16x128xf32> to vector<1x16x128xf32>
      tpu.vector_store %arg9[%c0_15, %c0_16, %c0_17], %33 {strides = array<i32>} : memref<1x16x128xf32, #tpu.memory_space<vmem>>, vector<1x16x128xf32>,
    } else {
    }
    return
  }
  func.func @transform_0(%arg0: i32, %arg1: i32) -> (i32, i32, i32) {
    %c1_i32 = arith.constant 1 : i32
    %0 = arith.subi %c1_i32, %arg0 : i32
    %1 = arith.muli %arg1, %0 : i32
    %c0_i32 = arith.constant 0 : i32
    %c0_i32_0 = arith.constant 0 : i32
    %c0_i32_1 = arith.constant 0 : i32
    return %1, %c0_i32, %c0_i32_0 : i32, i32, i32
  }
  func.func @transform_1(%arg0: i32, %arg1: i32) -> (i32, i32, i32) {
    %c0_i32 = arith.constant 0 : i32
    %c0_i32_0 = arith.constant 0 : i32
    %c0_i32_1 = arith.constant 0 : i32
    %c0_i32_2 = arith.constant 0 : i32
    return %c0_i32, %c0_i32_0, %c0_i32_1 : i32, i32, i32
  }
  func.func @transform_2(%arg0: i32, %arg1: i32) -> (i32, i32) {
    %c0_i32 = arith.constant 0 : i32
    %c0_i32_0 = arith.constant 0 : i32
    %c0_i32_1 = arith.constant 0 : i32
    return %c0_i32, %c0_i32_0 : i32, i32
  }
  func.func @transform_3(%arg0: i32, %arg1: i32) -> (i32, i32) {
    %c0_i32 = arith.constant 0 : i32
    %c0_i32_0 = arith.constant 0 : i32
    %c0_i32_1 = arith.constant 0 : i32
    return %c0_i32, %c0_i32_0 : i32, i32
  }
  func.func @transform_4(%arg0: i32, %arg1: i32) -> (i32, i32) {
    %c0_i32 = arith.constant 0 : i32
    %c0_i32_0 = arith.constant 0 : i32
    %c0_i32_1 = arith.constant 0 : i32
    return %c0_i32, %c0_i32_0 : i32, i32
  }
  func.func @transform_5(%arg0: i32, %arg1: i32) -> (i32, i32) {
    %c0_i32 = arith.constant 0 : i32
    %c0_i32_0 = arith.constant 0 : i32
    %c0_i32_1 = arith.constant 0 : i32
    return %c0_i32, %c0_i32_0 : i32, i32
  }
  func.func @transform_6(%arg0: i32, %arg1: i32) -> (i32, i32) {
    %c0_i32 = arith.constant 0 : i32
    %c0_i32_0 = arith.constant 0 : i32
    %c0_i32_1 = arith.constant 0 : i32
    return %c0_i32, %c0_i32_0 : i32, i32
  }
  func.func @transform_7(%arg0: i32, %arg1: i32) -> (i32, i32, i32) {
    %0 = arith.muli %arg0, %arg1 : i32
    %c0_i32 = arith.constant 0 : i32
    %c0_i32_0 = arith.constant 0 : i32
    %c0_i32_1 = arith.constant 0 : i32
    return %0, %c0_i32, %c0_i32_0 : i32, i32, i32
  }
}

</mosaic_0001>

<llo_original>
// kernel: tile.38
$region0: #{tile.38}
  #allocation0 [shape = 's32[1]{0}', space=sflag, size = 0x4, scoped, tag = 'scoped memory for tile.38']
  %s0 = inlined_call_operand.vmem [shape: f32[8], index: 0, kind: input, shape index: {}]
  %s1 = inlined_call_operand.vmem [shape: f32[16,8], index: 1, kind: output, shape index: {}]
  // Predicated region
  $region2: #{tile.38} parent=0 // pred_check
    _
  $region3: #{tile.38} parent=0 // pred_check_branch
    %3 = sbr.rel (0) target = $region5
  $region4: #{tile.38} parent=0 // pred_region
    _
  $region5: #{tile.38} parent=0 // pred_fallthru
    _
  %v4 = vld [vmem:[%s0] ss:$0 sm:$0xff]
  %5 = vst [vmem:[%s1] sm:$0xff] %v4
  %s6 = scalar_lea.vmem %s1, 8
  %7 = vst [vmem:[%s6] sm:$0xff] %v4

// kernel: tile.39
$region0: #{tile.39}
  %s0 = inlined_call_operand.vmem [shape: f32[16,8], index: 0, kind: input, shape index: {}]
  %s1 = inlined_call_operand.vmem [shape: f32[1,128], index: 1, kind: output, shape index: {}]
  $region1: #{tile.39} parent=0
    #allocation0 [shape = 'u8[4096]{0}', space=vmem, size = 0x1000, scoped, tag = 'scoped mem for output reshape']
    %v2 = vld [vmem:[%s0] sm:$0x1]
    %vm3 = vcmask 64512
    %4 = vst.msk [vmem:[#allocation0] sm:$0x1] %vm3, %v2
    %s5 = scalar_lea.vmem %s0, 15
    %v6 = vld [vmem:[%s5] sm:$0x1]
    %7 = vrot.lane.b32.xlu0 %v6, 120
    %v8 = vpop.permute.xlu0 %7
    %vm9 = vcmask 1048512
    %10 = vst.msk [vmem:[#allocation0] sm:$0x1] %vm9, %v8
    %s11 = scalar_lea.vmem %s0, 14
    %v12 = vld [vmem:[%s11] sm:$0x1]
    %13 = vrot.lane.b32.xlu0 %v12, 112
    %v14 = vpop.permute.xlu0 %13
    %vm15 = vcmask 982912
    %16 = vst.msk [vmem:[#allocation0] sm:$0x1] %vm15, %v14
    %s17 = scalar_lea.vmem %s0, 13
    %v18 = vld [vmem:[%s17] sm:$0x1]
    %19 = vrot.lane.b32.xlu0 %v18, 104
    %v20 = vpop.permute.xlu0 %19
    %vm21 = vcmask 917312
    %22 = vst.msk [vmem:[#allocation0] sm:$0x1] %vm21, %v20
    %s23 = scalar_lea.vmem %s0, 12
    %v24 = vld [vmem:[%s23] sm:$0x1]
    %25 = vrot.lane.b32.xlu0 %v24, 96
    %v26 = vpop.permute.xlu0 %25
    %vm27 = vcmask 851712
    %28 = vst.msk [vmem:[#allocation0] sm:$0x1] %vm27, %v26
    %s29 = scalar_lea.vmem %s0, 11
    %v30 = vld [vmem:[%s29] sm:$0x1]
    %31 = vrot.lane.b32.xlu0 %v30, 88
    %v32 = vpop.permute.xlu0 %31
    %vm33 = vcmask 786112
    %34 = vst.msk [vmem:[#allocation0] sm:$0x1] %vm33, %v32
    %s35 = scalar_lea.vmem %s0, 10
    %v36 = vld [vmem:[%s35] sm:$0x1]
    %37 = vrot.lane.b32.xlu0 %v36, 80
    %v38 = vpop.permute.xlu0 %37
    %vm39 = vcmask 720512
    %40 = vst.msk [vmem:[#allocation0] sm:$0x1] %vm39, %v38
    %s41 = scalar_lea.vmem %s0, 9
    %v42 = vld [vmem:[%s41] sm:$0x1]
    %43 = vrot.lane.b32.xlu0 %v42, 72
    %v44 = vpop.permute.xlu0 %43
    %vm45 = vcmask 654912
    %46 = vst.msk [vmem:[#allocation0] sm:$0x1] %vm45, %v44
    %s47 = scalar_lea.vmem %s0, 8
    %v48 = vld [vmem:[%s47] sm:$0x1]
    %49 = vrot.lane.b32.xlu0 %v48, 64
    %v50 = vpop.permute.xlu0 %49
    %vm51 = vcmask 589312
    %52 = vst.msk [vmem:[#allocation0] sm:$0x1] %vm51, %v50
    %s53 = scalar_lea.vmem %s0, 7
    %v54 = vld [vmem:[%s53] sm:$0x1]
    %55 = vrot.lane.b32.xlu0 %v54, 56
    %v56 = vpop.permute.xlu0 %55
    %vm57 = vcmask 523712
    %58 = vst.msk [vmem:[#allocation0] sm:$0x1] %vm57, %v56
    %s59 = scalar_lea.vmem %s0, 6
    %v60 = vld [vmem:[%s59] sm:$0x1]
    %61 = vrot.lane.b32.xlu0 %v60, 48
    %v62 = vpop.permute.xlu0 %61
    %vm63 = vcmask 458112
    %64 = vst.msk [vmem:[#allocation0] sm:$0x1] %vm63, %v62
    %s65 = scalar_lea.vmem %s0, 5
    %v66 = vld [vmem:[%s65] sm:$0x1]
    %67 = vrot.lane.b32.xlu0 %v66, 40
    %v68 = vpop.permute.xlu0 %67
    %vm69 = vcmask 392512
    %70 = vst.msk [vmem:[#allocation0] sm:$0x1] %vm69, %v68
    %s71 = scalar_lea.vmem %s0, 4
    %v72 = vld [vmem:[%s71] sm:$0x1]
    %73 = vrot.lane.b32.xlu0 %v72, 32
    %v74 = vpop.permute.xlu0 %73
    %vm75 = vcmask 326912
    %76 = vst.msk [vmem:[#allocation0] sm:$0x1] %vm75, %v74
    %s77 = scalar_lea.vmem %s0, 3
    %v78 = vld [vmem:[%s77] sm:$0x1]
    %79 = vrot.lane.b32.xlu0 %v78, 24
    %v80 = vpop.permute.xlu0 %79
    %vm81 = vcmask 261312
    %82 = vst.msk [vmem:[#allocation0] sm:$0x1] %vm81, %v80
    %s83 = scalar_lea.vmem %s0, 2
    %v84 = vld [vmem:[%s83] sm:$0x1]
    %85 = vrot.lane.b32.xlu0 %v84, 16
    %v86 = vpop.permute.xlu0 %85
    %vm87 = vcmask 195712
    %88 = vst.msk [vmem:[#allocation0] sm:$0x1] %vm87, %v86
    %s89 = scalar_lea.vmem %s0, 1
    %v90 = vld [vmem:[%s89] sm:$0x1]
    %91 = vrot.lane.b32.xlu0 %v90, 8
    %v92 = vpop.permute.xlu0 %91
    %vm93 = vcmask 130112
    %94 = vst.msk [vmem:[#allocation0] sm:$0x1] %vm93, %v92
    %s96 = sshllo.u32 0, 1
    %v98 = vld [vmem:[#allocation0] sm:%s96]
    %s99 = sshllo.u32 0, 1
    %100 = vst [vmem:[%s1] sm:%s99] %v98

// kernel: tile.34
$region0: #{tile.34}
  %s0 = inlined_call_operand.vmem [shape: f32[8,16,8], index: 0, kind: input, shape index: {}]
  %s1 = inlined_call_operand.vmem [shape: f32[8,128], index: 1, kind: output, shape index: {}]
  %s2 = smov 3
  %v3 = vld [vmem:[%s0] ss:$16 sm:%s2]
  %s4 = smov 12
  %v5 = vld [vmem:[%s0] ss:$16 sm:%s4]
  %vm6 = vcmask 1043458
  %v7 = vsel %vm6, %v5, %v3
  %s8 = smov 48
  %v9 = vld [vmem:[%s0] ss:$16 sm:%s8]
  %vm10 = vcmask 1045508
  %v11 = vsel %vm10, %v9, %v7
  %s12 = smov 192
  %v13 = vld [vmem:[%s0] ss:$16 sm:%s12]
  %vm14 = vcmask 1047558
  %v15 = vsel %vm14, %v13, %v11
  %vm16 = vcmask 64512
  %17 = vst.msk [vmem:[%s1] sm:$0xff] %vm16, %v15
  %s18 = scalar_lea.vmem %s0, 15
  %s19 = smov 3
  %v20 = vld [vmem:[%s18] ss:$16 sm:%s19]
  %s21 = scalar_lea.vmem %s0, 15
  %s22 = smov 12
  %v23 = vld [vmem:[%s21] ss:$16 sm:%s22]
  %vm24 = vcmask 1043458
  %v25 = vsel %vm24, %v23, %v20
  %s26 = scalar_lea.vmem %s0, 15
  %s27 = smov 48
  %v28 = vld [vmem:[%s26] ss:$16 sm:%s27]
  %vm29 = vcmask 1045508
  %v30 = vsel %vm29, %v28, %v25
  %s31 = scalar_lea.vmem %s0, 15
  %s32 = smov 192
  %v33 = vld [vmem:[%s31] ss:$16 sm:%s32]
  %vm34 = vcmask 1047558
  %v35 = vsel %vm34, %v33, %v30
  %36 = vrot.lane.b32.xlu0 %v35, 120
  %v37 = vpop.permute.xlu0 %36
  %vm38 = vcmask 1048512
  %39 = vst.msk [vmem:[%s1] sm:$0xff] %vm38, %v37
  %s40 = scalar_lea.vmem %s0, 14
  %s41 = smov 3
  %v42 = vld [vmem:[%s40] ss:$16 sm:%s41]
  %s43 = scalar_lea.vmem %s0, 14
  %s44 = smov 12
  %v45 = vld [vmem:[%s43] ss:$16 sm:%s44]
  %vm46 = vcmask 1043458
  %v47 = vsel %vm46, %v45, %v42
  %s48 = scalar_lea.vmem %s0, 14
  %s49 = smov 48
  %v50 = vld [vmem:[%s48] ss:$16 sm:%s49]
  %vm51 = vcmask 1045508
  %v52 = vsel %vm51, %v50, %v47
  %s53 = scalar_lea.vmem %s0, 14
  %s54 = smov 192
  %v55 = vld [vmem:[%s53] ss:$16 sm:%s54]
  %vm56 = vcmask 1047558
  %v57 = vsel %vm56, %v55, %v52
  %58 = vrot.lane.b32.xlu0 %v57, 112
  %v59 = vpop.permute.xlu0 %58
  %vm60 = vcmask 982912
  %61 = vst.msk [vmem:[%s1] sm:$0xff] %vm60, %v59
  %s62 = scalar_lea.vmem %s0, 13
  %s63 = smov 3
  %v64 = vld [vmem:[%s62] ss:$16 sm:%s63]
  %s65 = scalar_lea.vmem %s0, 13
  %s66 = smov 12
  %v67 = vld [vmem:[%s65] ss:$16 sm:%s66]
  %vm68 = vcmask 1043458
  %v69 = vsel %vm68, %v67, %v64
  %s70 = scalar_lea.vmem %s0, 13
  %s71 = smov 48
  %v72 = vld [vmem:[%s70] ss:$16 sm:%s71]
  %vm73 = vcmask 1045508
  %v74 = vsel %vm73, %v72, %v69
  %s75 = scalar_lea.vmem %s0, 13
  %s76 = smov 192
  %v77 = vld [vmem:[%s75] ss:$16 sm:%s76]
  %vm78 = vcmask 1047558
  %v79 = vsel %vm78, %v77, %v74
  %80 = vrot.lane.b32.xlu0 %v79, 104
  %v81 = vpop.permute.xlu0 %80
  %vm82 = vcmask 917312
  %83 = vst.msk [vmem:[%s1] sm:$0xff] %vm82, %v81
  %s84 = scalar_lea.vmem %s0, 12
  %s85 = smov 3
  %v86 = vld [vmem:[%s84] ss:$16 sm:%s85]
  %s87 = scalar_lea.vmem %s0, 12
  %s88 = smov 12
  %v89 = vld [vmem:[%s87] ss:$16 sm:%s88]
  %vm90 = vcmask 1043458
  %v91 = vsel %vm90, %v89, %v86
  %s92 = scalar_lea.vmem %s0, 12
  %s93 = smov 48
  %v94 = vld [vmem:[%s92] ss:$16 sm:%s93]
  %vm95 = vcmask 1045508
  %v96 = vsel %vm95, %v94, %v91
  %s97 = scalar_lea.vmem %s0, 12
  %s98 = smov 192
  %v99 = vld [vmem:[%s97] ss:$16 sm:%s98]
  %vm100 = vcmask 1047558
  %v101 = vsel %vm100, %v99, %v96
  %102 = vrot.lane.b32.xlu0 %v101, 96
  %v103 = vpop.permute.xlu0 %102
  %vm104 = vcmask 851712
  %105 = vst.msk [vmem:[%s1] sm:$0xff] %vm104, %v103
  %s106 = scalar_lea.vmem %s0, 11
  %s107 = smov 3
  %v108 = vld [vmem:[%s106] ss:$16 sm:%s107]
  %s109 = scalar_lea.vmem %s0, 11
  %s110 = smov 12
  %v111 = vld [vmem:[%s109] ss:$16 sm:%s110]
  %vm112 = vcmask 1043458
  %v113 = vsel %vm112, %v111, %v108
  %s114 = scalar_lea.vmem %s0, 11
  %s115 = smov 48
  %v116 = vld [vmem:[%s114] ss:$16 sm:%s115]
  %vm117 = vcmask 1045508
  %v118 = vsel %vm117, %v116, %v113
  %s119 = scalar_lea.vmem %s0, 11
  %s120 = smov 192
  %v121 = vld [vmem:[%s119] ss:$16 sm:%s120]
  %vm122 = vcmask 1047558
  %v123 = vsel %vm122, %v121, %v118
  %124 = vrot.lane.b32.xlu0 %v123, 88
  %v125 = vpop.permute.xlu0 %124
  %vm126 = vcmask 786112
  %127 = vst.msk [vmem:[%s1] sm:$0xff] %vm126, %v125
  %s128 = scalar_lea.vmem %s0, 10
  %s129 = smov 3
  %v130 = vld [vmem:[%s128] ss:$16 sm:%s129]
  %s131 = scalar_lea.vmem %s0, 10
  %s132 = smov 12
  %v133 = vld [vmem:[%s131] ss:$16 sm:%s132]
  %vm134 = vcmask 1043458
  %v135 = vsel %vm134, %v133, %v130
  %s136 = scalar_lea.vmem %s0, 10
  %s137 = smov 48
  %v138 = vld [vmem:[%s136] ss:$16 sm:%s137]
  %vm139 = vcmask 1045508
  %v140 = vsel %vm139, %v138, %v135
  %s141 = scalar_lea.vmem %s0, 10
  %s142 = smov 192
  %v143 = vld [vmem:[%s141] ss:$16 sm:%s142]
  %vm144 = vcmask 1047558
  %v145 = vsel %vm144, %v143, %v140
  %146 = vrot.lane.b32.xlu0 %v145, 80
  %v147 = vpop.permute.xlu0 %146
  %vm148 = vcmask 720512
  %149 = vst.msk [vmem:[%s1] sm:$0xff] %vm148, %v147
  %s150 = scalar_lea.vmem %s0, 9
  %s151 = smov 3
  %v152 = vld [vmem:[%s150] ss:$16 sm:%s151]
  %s153 = scalar_lea.vmem %s0, 9
  %s154 = smov 12
  %v155 = vld [vmem:[%s153] ss:$16 sm:%s154]
  %vm156 = vcmask 1043458
  %v157 = vsel %vm156, %v155, %v152
  %s158 = scalar_lea.vmem %s0, 9
  %s159 = smov 48
  %v160 = vld [vmem:[%s158] ss:$16 sm:%s159]
  %vm161 = vcmask 1045508
  %v162 = vsel %vm161, %v160, %v157
  %s163 = scalar_lea.vmem %s0, 9
  %s164 = smov 192
  %v165 = vld [vmem:[%s163] ss:$16 sm:%s164]
  %vm166 = vcmask 1047558
  %v167 = vsel %vm166, %v165, %v162
  %168 = vrot.lane.b32.xlu0 %v167, 72
  %v169 = vpop.permute.xlu0 %168
  %vm170 = vcmask 654912
  %171 = vst.msk [vmem:[%s1] sm:$0xff] %vm170, %v169
  %s172 = scalar_lea.vmem %s0, 8
  %s173 = smov 3
  %v174 = vld [vmem:[%s172] ss:$16 sm:%s173]
  %s175 = scalar_lea.vmem %s0, 8
  %s176 = smov 12
  %v177 = vld [vmem:[%s175] ss:$16 sm:%s176]
  %vm178 = vcmask 1043458
  %v179 = vsel %vm178, %v177, %v174
  %s180 = scalar_lea.vmem %s0, 8
  %s181 = smov 48
  %v182 = vld [vmem:[%s180] ss:$16 sm:%s181]
  %vm183 = vcmask 1045508
  %v184 = vsel %vm183, %v182, %v179
  %s185 = scalar_lea.vmem %s0, 8
  %s186 = smov 192
  %v187 = vld [vmem:[%s185] ss:$16 sm:%s186]
  %vm188 = vcmask 1047558
  %v189 = vsel %vm188, %v187, %v184
  %190 = vrot.lane.b32.xlu0 %v189, 64
  %v191 = vpop.permute.xlu0 %190
  %vm192 = vcmask 589312
  %193 = vst.msk [vmem:[%s1] sm:$0xff] %vm192, %v191
  %s194 = scalar_lea.vmem %s0, 7
  %s195 = smov 3
  %v196 = vld [vmem:[%s194] ss:$16 sm:%s195]
  %s197 = scalar_lea.vmem %s0, 7
  %s198 = smov 12
  %v199 = vld [vmem:[%s197] ss:$16 sm:%s198]
  %vm200 = vcmask 1043458
  %v201 = vsel %vm200, %v199, %v196
  %s202 = scalar_lea.vmem %s0, 7
  %s203 = smov 48
  %v204 = vld [vmem:[%s202] ss:$16 sm:%s203]
  %vm205 = vcmask 1045508
  %v206 = vsel %vm205, %v204, %v201
  %s207 = scalar_lea.vmem %s0, 7
  %s208 = smov 192
  %v209 = vld [vmem:[%s207] ss:$16 sm:%s208]
  %vm210 = vcmask 1047558
  %v211 = vsel %vm210, %v209, %v206
  %212 = vrot.lane.b32.xlu0 %v211, 56
  %v213 = vpop.permute.xlu0 %212
  %vm214 = vcmask 523712
  %215 = vst.msk [vmem:[%s1] sm:$0xff] %vm214, %v213
  %s216 = scalar_lea.vmem %s0, 6
  %s217 = smov 3
  %v218 = vld [vmem:[%s216] ss:$16 sm:%s217]
  %s219 = scalar_lea.vmem %s0, 6
  %s220 = smov 12
  %v221 = vld [vmem:[%s219] ss:$16 sm:%s220]
  %vm222 = vcmask 1043458
  %v223 = vsel %vm222, %v221, %v218
  %s224 = scalar_lea.vmem %s0, 6
  %s225 = smov 48
  %v226 = vld [vmem:[%s224] ss:$16 sm:%s225]
  %vm227 = vcmask 1045508
  %v228 = vsel %vm227, %v226, %v223
  %s229 = scalar_lea.vmem %s0, 6
  %s230 = smov 192
  %v231 = vld [vmem:[%s229] ss:$16 sm:%s230]
  %vm232 = vcmask 1047558
  %v233 = vsel %vm232, %v231, %v228
  %234 = vrot.lane.b32.xlu0 %v233, 48
  %v235 = vpop.permute.xlu0 %234
  %vm236 = vcmask 458112
  %237 = vst.msk [vmem:[%s1] sm:$0xff] %vm236, %v235
  %s238 = scalar_lea.vmem %s0, 5
  %s239 = smov 3
  %v240 = vld [vmem:[%s238] ss:$16 sm:%s239]
  %s241 = scalar_lea.vmem %s0, 5
  %s242 = smov 12
  %v243 = vld [vmem:[%s241] ss:$16 sm:%s242]
  %vm244 = vcmask 1043458
  %v245 = vsel %vm244, %v243, %v240
  %s246 = scalar_lea.vmem %s0, 5
  %s247 = smov 48
  %v248 = vld [vmem:[%s246] ss:$16 sm:%s247]
  %vm249 = vcmask 1045508
  %v250 = vsel %vm249, %v248, %v245
  %s251 = scalar_lea.vmem %s0, 5
  %s252 = smov 192
  %v253 = vld [vmem:[%s251] ss:$16 sm:%s252]
  %vm254 = vcmask 1047558
  %v255 = vsel %vm254, %v253, %v250
  %256 = vrot.lane.b32.xlu0 %v255, 40
  %v257 = vpop.permute.xlu0 %256
  %vm258 = vcmask 392512
  %259 = vst.msk [vmem:[%s1] sm:$0xff] %vm258, %v257
  %s260 = scalar_lea.vmem %s0, 4
  %s261 = smov 3
  %v262 = vld [vmem:[%s260] ss:$16 sm:%s261]
  %s263 = scalar_lea.vmem %s0, 4
  %s264 = smov 12
  %v265 = vld [vmem:[%s263] ss:$16 sm:%s264]
  %vm266 = vcmask 1043458
  %v267 = vsel %vm266, %v265, %v262
  %s268 = scalar_lea.vmem %s0, 4
  %s269 = smov 48
  %v270 = vld [vmem:[%s268] ss:$16 sm:%s269]
  %vm271 = vcmask 1045508
  %v272 = vsel %vm271, %v270, %v267
  %s273 = scalar_lea.vmem %s0, 4
  %s274 = smov 192
  %v275 = vld [vmem:[%s273] ss:$16 sm:%s274]
  %vm276 = vcmask 1047558
  %v277 = vsel %vm276, %v275, %v272
  %278 = vrot.lane.b32.xlu0 %v277, 32
  %v279 = vpop.permute.xlu0 %278
  %vm280 = vcmask 326912
  %281 = vst.msk [vmem:[%s1] sm:$0xff] %vm280, %v279
  %s282 = scalar_lea.vmem %s0, 3
  %s283 = smov 3
  %v284 = vld [vmem:[%s282] ss:$16 sm:%s283]
  %s285 = scalar_lea.vmem %s0, 3
  %s286 = smov 12
  %v287 = vld [vmem:[%s285] ss:$16 sm:%s286]
  %vm288 = vcmask 1043458
  %v289 = vsel %vm288, %v287, %v284
  %s290 = scalar_lea.vmem %s0, 3
  %s291 = smov 48
  %v292 = vld [vmem:[%s290] ss:$16 sm:%s291]
  %vm293 = vcmask 1045508
  %v294 = vsel %vm293, %v292, %v289
  %s295 = scalar_lea.vmem %s0, 3
  %s296 = smov 192
  %v297 = vld [vmem:[%s295] ss:$16 sm:%s296]
  %vm298 = vcmask 1047558
  %v299 = vsel %vm298, %v297, %v294
  %300 = vrot.lane.b32.xlu0 %v299, 24
  %v301 = vpop.permute.xlu0 %300
  %vm302 = vcmask 261312
  %303 = vst.msk [vmem:[%s1] sm:$0xff] %vm302, %v301
  %s304 = scalar_lea.vmem %s0, 2
  %s305 = smov 3
  %v306 = vld [vmem:[%s304] ss:$16 sm:%s305]
  %s307 = scalar_lea.vmem %s0, 2
  %s308 = smov 12
  %v309 = vld [vmem:[%s307] ss:$16 sm:%s308]
  %vm310 = vcmask 1043458
  %v311 = vsel %vm310, %v309, %v306
  %s312 = scalar_lea.vmem %s0, 2
  %s313 = smov 48
  %v314 = vld [vmem:[%s312] ss:$16 sm:%s313]
  %vm315 = vcmask 1045508
  %v316 = vsel %vm315, %v314, %v311
  %s317 = scalar_lea.vmem %s0, 2
  %s318 = smov 192
  %v319 = vld [vmem:[%s317] ss:$16 sm:%s318]
  %vm320 = vcmask 1047558
  %v321 = vsel %vm320, %v319, %v316
  %322 = vrot.lane.b32.xlu0 %v321, 16
  %v323 = vpop.permute.xlu0 %322
  %vm324 = vcmask 195712
  %325 = vst.msk [vmem:[%s1] sm:$0xff] %vm324, %v323
  %s326 = scalar_lea.vmem %s0, 1
  %s327 = smov 3
  %v328 = vld [vmem:[%s326] ss:$16 sm:%s327]
  %s329 = scalar_lea.vmem %s0, 1
  %s330 = smov 12
  %v331 = vld [vmem:[%s329] ss:$16 sm:%s330]
  %vm332 = vcmask 1043458
  %v333 = vsel %vm332, %v331, %v328
  %s334 = scalar_lea.vmem %s0, 1
  %s335 = smov 48
  %v336 = vld [vmem:[%s334] ss:$16 sm:%s335]
  %vm337 = vcmask 1045508
  %v338 = vsel %vm337, %v336, %v333
  %s339 = scalar_lea.vmem %s0, 1
  %s340 = smov 192
  %v341 = vld [vmem:[%s339] ss:$16 sm:%s340]
  %vm342 = vcmask 1047558
  %v343 = vsel %vm342, %v341, %v338
  %344 = vrot.lane.b32.xlu0 %v343, 8
  %v345 = vpop.permute.xlu0 %344
  %vm346 = vcmask 130112
  %347 = vst.msk [vmem:[%s1] sm:$0xff] %vm346, %v345

// kernel: conv_block_forward.1
$region0: #{conv_block_forward.1}
  #allocation0 [shape = 'u32[]', space=smem, size = 0x4, offset = 0x4, fixed_abs, tag = 'smem constant byte address 0x4 - core index']
  #allocation1 [shape = 'u32[144,128]{1,0:T(1,128)}', space=vmem, size = 0x12000, scoped, tag = 'internal scratch']
  #allocation2 [shape = 'f32[2,16,128]{2,1,0:T(8,128)}', space=vmem, size = 0x4000, scoped, tag = 'scratch operand']
  #allocation3 [shape = 'f32[1,128]{1,0:T(1,128)}', space=vmem, size = 0x200, scoped, tag = 'scratch operand']
  #allocation4 [shape = 'f32[1,128]{1,0:T(1,128)}', space=vmem, size = 0x200, scoped, tag = 'scratch operand']
  #allocation5 [shape = 'f32[1,128]{1,0:T(1,128)}', space=vmem, size = 0x200, scoped, tag = 'scratch operand']
  #allocation6 [shape = 'f32[1,128]{1,0:T(1,128)}', space=vmem, size = 0x200, scoped, tag = 'scratch operand']
  %s0 = inlined_call_operand.vmem [shape: bf16[2,16,64], index: 0, kind: input, shape index: {}]
  %s1 = inlined_call_operand.vmem [shape: bf16[1,64,128], index: 1, kind: input, shape index: {}]
  %s2 = inlined_call_operand.vmem [shape: f32[128,8], index: 2, kind: input, shape index: {}]
  %s3 = inlined_call_operand.vmem [shape: f32[8,128], index: 3, kind: input, shape index: {}]
  %s4 = inlined_call_operand.vmem [shape: f32[1,128], index: 4, kind: input, shape index: {}]
  %s5 = inlined_call_operand.vmem [shape: f32[1,128], index: 5, kind: input, shape index: {}]
  %s6 = inlined_call_operand.vmem [shape: f32[1,128], index: 6, kind: input, shape index: {}]
  %s7 = inlined_call_operand.vmem [shape: f32[2,16,128], index: 7, kind: output, shape index: {}]
  %s8 = sld [smem:[#allocation0]]
  $region77: #{conv_block_forward.1} parent=0
    _
  %s10 = ssub.s32 1, %s8
  %s11 = scalar_select 0, %s10, %s8
  loop: start=0, step=1, limit=6
  $region2: #{conv_block_forward.1} parent=0 // loop_pre_header
    _
  $region3: #{conv_block_forward.1} parent=0 // loop_header
    %s13 = sphi 0, %s17
    %p14 = scmp.ge.s32.totalorder %s13, 6
    %s20 = sphi 0, %s32
    %s21 = sphi 0, %s28
    %s22 = sphi 0, %s20
    %s23 = sphi 0, %s21
    %s24 = sphi 0, %s22
    %s25 = sphi 0, %s23
    %s39 = sphi 0, %s41
    %s42 = sphi 0, %s39
    %s43 = sphi 0, %s42
    %s59 = sphi 0, %s43
    %s63 = sphi 0, %s63
    %s65 = sphi 0, %s63
    %s66 = sphi 0, %s65
    %s80 = sphi 0, %s66
    %s84 = sphi 0, %s84
    %s86 = sphi 0, %s84
    %s87 = sphi 0, %s86
    %s101 = sphi 0, %s87
    %s105 = sphi 0, %s105
    %s107 = sphi 0, %s105
    %s108 = sphi 0, %s107
    %s122 = sphi 0, %s108
    %s126 = sphi 0, %s126
    %s128 = sphi 0, %s126
    %s129 = sphi 0, %s128
    %s143 = sphi 0, %s129
    %s147 = sphi 0, %s147
    %s149 = sphi 0, %s147
    %s150 = sphi 0, %s149
    %s164 = sphi 0, %s150
    %s168 = sphi 0, %s168
    %s170 = sphi 0, %s168
    %s171 = sphi 0, %s170
    %s185 = sphi 0, %s171
    %s193 = sphi 0, %s195
    %s196 = sphi 0, %s193
    %s197 = sphi 0, %s196
    %s213 = sphi 0, %s197
  $region4: #{conv_block_forward.1} parent=0 // loop_header_branch
    %16 = sbr.rel (%p14) target = $region8
  $region5: #{conv_block_forward.1} parent=0 // loop_body
    %s18 = ssub.s32 %s13, 1
    %s19 = ssub.s32 %s13, 2
    %s26 = sadd.s32 1, %s21
    %p27 = scmp.ge.s32.totalorder %s26, 2
    %s28 = scalar_select %p27, 0, %s26
    %s29 = sadd.s32 1, %s20
    %s30 = scalar_select %p27, %s29, %s20
    %p31 = scmp.ge.s32.totalorder %s30, 2
    %s32 = scalar_select %p31, 0, %s30
    %s33 = ssub.s32 1, %s20
    %s34 = smul.u32 %s21, %s33
    %s35 = ssub.s32 1, %s32
    %s36 = smul.u32 %s28, %s35
    %s37 = ssub.s32 %s34, %s36
    %p38 = scmp.eq.s32.totalorder %s37, 0
    %s40 = sadd.s32 %s39, 1
    %s41 = scalar_select %p38, %s39, %s40
    %p44 = pneg %p38
    %p45 = scmp.eq.s32.totalorder %s13, 3
    %p46 = por %p44, %p45
    %p47 = scmp.ne.s32.totalorder %s39, %s42
    %p48 = scmp.eq.s32.totalorder %s13, 0
    %p49 = por %p47, %p48
    %p50 = scmp.ne.s32.totalorder %s39, %s42
    %p51 = scmp.eq.s32.totalorder %s18, 3
    %p52 = por %p50, %p51
    %p53 = scmp.ne.s32.totalorder %s42, %s43
    %p54 = scmp.eq.s32.totalorder %s18, 0
    %p55 = por %p53, %p54
    %p56 = scmp.ne.s32.totalorder %s42, %s43
    %p57 = scmp.eq.s32.totalorder %s19, 3
    %p58 = por %p56, %p57
    %p60 = scmp.ne.s32.totalorder %s43, %s59
    %p61 = scmp.eq.s32.totalorder %s19, 0
    %p62 = por %p60, %p61
    %s64 = sadd.s32 %s63, 1
    %p67 = scmp.eq.s32.totalorder %s13, 3
    %p68 = scmp.ne.s32.totalorder %s63, %s65
    %p69 = scmp.eq.s32.totalorder %s13, 0
    %p70 = por %p68, %p69
    %p71 = scmp.ne.s32.totalorder %s63, %s65
    %p72 = scmp.eq.s32.totalorder %s18, 3
    %p73 = por %p71, %p72
    %p74 = scmp.ne.s32.totalorder %s65, %s66
    %p75 = scmp.eq.s32.totalorder %s18, 0
    %p76 = por %p74, %p75
    %p77 = scmp.ne.s32.totalorder %s65, %s66
    %p78 = scmp.eq.s32.totalorder %s19, 3
    %p79 = por %p77, %p78
    %p81 = scmp.ne.s32.totalorder %s66, %s80
    %p82 = scmp.eq.s32.totalorder %s19, 0
    %p83 = por %p81, %p82
    %s85 = sadd.s32 %s84, 1
    %p88 = scmp.eq.s32.totalorder %s13, 3
    %p89 = scmp.ne.s32.totalorder %s84, %s86
    %p90 = scmp.eq.s32.totalorder %s13, 0
    %p91 = por %p89, %p90
    %p92 = scmp.ne.s32.totalorder %s84, %s86
    %p93 = scmp.eq.s32.totalorder %s18, 3
    %p94 = por %p92, %p93
    %p95 = scmp.ne.s32.totalorder %s86, %s87
    %p96 = scmp.eq.s32.totalorder %s18, 0
    %p97 = por %p95, %p96
    %p98 = scmp.ne.s32.totalorder %s86, %s87
    %p99 = scmp.eq.s32.totalorder %s19, 3
    %p100 = por %p98, %p99
    %p102 = scmp.ne.s32.totalorder %s87, %s101
    %p103 = scmp.eq.s32.totalorder %s19, 0
    %p104 = por %p102, %p103
    %s106 = sadd.s32 %s105, 1
    %p109 = scmp.eq.s32.totalorder %s13, 3
    %p110 = scmp.ne.s32.totalorder %s105, %s107
    %p111 = scmp.eq.s32.totalorder %s13, 0
    %p112 = por %p110, %p111
    %p113 = scmp.ne.s32.totalorder %s105, %s107
    %p114 = scmp.eq.s32.totalorder %s18, 3
    %p115 = por %p113, %p114
    %p116 = scmp.ne.s32.totalorder %s107, %s108
    %p117 = scmp.eq.s32.totalorder %s18, 0
    %p118 = por %p116, %p117
    %p119 = scmp.ne.s32.totalorder %s107, %s108
    %p120 = scmp.eq.s32.totalorder %s19, 3
    %p121 = por %p119, %p120
    %p123 = scmp.ne.s32.totalorder %s108, %s122
    %p124 = scmp.eq.s32.totalorder %s19, 0
    %p125 = por %p123, %p124
    %s127 = sadd.s32 %s126, 1
    %p130 = scmp.eq.s32.totalorder %s13, 3
    %p131 = scmp.ne.s32.totalorder %s126, %s128
    %p132 = scmp.eq.s32.totalorder %s13, 0
    %p133 = por %p131, %p132
    %p134 = scmp.ne.s32.totalorder %s126, %s128
    %p135 = scmp.eq.s32.totalorder %s18, 3
    %p136 = por %p134, %p135
    %p137 = scmp.ne.s32.totalorder %s128, %s129
    %p138 = scmp.eq.s32.totalorder %s18, 0
    %p139 = por %p137, %p138
    %p140 = scmp.ne.s32.totalorder %s128, %s129
    %p141 = scmp.eq.s32.totalorder %s19, 3
    %p142 = por %p140, %p141
    %p144 = scmp.ne.s32.totalorder %s129, %s143
    %p145 = scmp.eq.s32.totalorder %s19, 0
    %p146 = por %p144, %p145
    %s148 = sadd.s32 %s147, 1
    %p151 = scmp.eq.s32.totalorder %s13, 3
    %p152 = scmp.ne.s32.totalorder %s147, %s149
    %p153 = scmp.eq.s32.totalorder %s13, 0
    %p154 = por %p152, %p153
    %p155 = scmp.ne.s32.totalorder %s147, %s149
    %p156 = scmp.eq.s32.totalorder %s18, 3
    %p157 = por %p155, %p156
    %p158 = scmp.ne.s32.totalorder %s149, %s150
    %p159 = scmp.eq.s32.totalorder %s18, 0
    %p160 = por %p158, %p159
    %p161 = scmp.ne.s32.totalorder %s149, %s150
    %p162 = scmp.eq.s32.totalorder %s19, 3
    %p163 = por %p161, %p162
    %p165 = scmp.ne.s32.totalorder %s150, %s164
    %p166 = scmp.eq.s32.totalorder %s19, 0
    %p167 = por %p165, %p166
    %s169 = sadd.s32 %s168, 1
    %p172 = scmp.eq.s32.totalorder %s13, 3
    %p173 = scmp.ne.s32.totalorder %s168, %s170
    %p174 = scmp.eq.s32.totalorder %s13, 0
    %p175 = por %p173, %p174
    %p176 = scmp.ne.s32.totalorder %s168, %s170
    %p177 = scmp.eq.s32.totalorder %s18, 3
    %p178 = por %p176, %p177
    %p179 = scmp.ne.s32.totalorder %s170, %s171
    %p180 = scmp.eq.s32.totalorder %s18, 0
    %p181 = por %p179, %p180
    %p182 = scmp.ne.s32.totalorder %s170, %s171
    %p183 = scmp.eq.s32.totalorder %s19, 3
    %p184 = por %p182, %p183
    %p186 = scmp.ne.s32.totalorder %s171, %s185
    %p187 = scmp.eq.s32.totalorder %s19, 0
    %p188 = por %p186, %p187
    %s189 = smul.u32 %s20, %s21
    %s190 = smul.u32 %s32, %s28
    %s191 = ssub.s32 %s189, %s190
    %p192 = scmp.eq.s32.totalorder %s191, 0
    %s194 = sadd.s32 %s193, 1
    %s195 = scalar_select %p192, %s193, %s194
    %p198 = pneg %p192
    %p199 = scmp.eq.s32.totalorder %s13, 3
    %p200 = por %p198, %p199
    %p201 = scmp.ne.s32.totalorder %s193, %s196
    %p202 = scmp.eq.s32.totalorder %s13, 0
    %p203 = por %p201, %p202
    %p204 = scmp.ne.s32.totalorder %s193, %s196
    %p205 = scmp.eq.s32.totalorder %s18, 3
    %p206 = por %p204, %p205
    %p207 = scmp.ne.s32.totalorder %s196, %s197
    %p208 = scmp.eq.s32.totalorder %s18, 0
    %p209 = por %p207, %p208
    %p210 = scmp.ne.s32.totalorder %s196, %s197
    %p211 = scmp.eq.s32.totalorder %s19, 3
    %p212 = por %p210, %p211
    %p214 = scmp.ne.s32.totalorder %s197, %s213
    %p215 = scmp.eq.s32.totalorder %s19, 0
    %p216 = por %p214, %p215
    %p217 = scmp.le.s32.totalorder 1, %s13
    %p218 = scmp.lt.s32.totalorder %s13, 5
    %p219 = pnand %p217, %p218
    %p220 = pneg %p219
    // Predicated region
    $region9: #{conv_block_forward.1} parent=5 // pred_check
      _
    $region10: #{conv_block_forward.1} parent=5 // pred_check_branch
      %222 = sbr.rel (%p219) target = $region12
    $region11: #{conv_block_forward.1} parent=5 // pred_region
      %s223 = ssub.s32 %s13, 1
      // Predicated region
      $region13: #{conv_block_forward.1} parent=11 // pred_check
        %p224 = pneg %p76
      $region14: #{conv_block_forward.1} parent=11 // pred_check_branch
        %226 = sbr.rel (%p224) target = $region16
      $region15: #{conv_block_forward.1} parent=11 // pred_region
        _
      $region16: #{conv_block_forward.1} parent=11 // pred_fallthru
        _
      // Predicated region
      $region17: #{conv_block_forward.1} parent=11 // pred_check
        %p227 = pneg %p97
      $region18: #{conv_block_forward.1} parent=11 // pred_check_branch
        %229 = sbr.rel (%p227) target = $region20
      $region19: #{conv_block_forward.1} parent=11 // pred_region
        _
      $region20: #{conv_block_forward.1} parent=11 // pred_fallthru
        _
      // Predicated region
      $region21: #{conv_block_forward.1} parent=11 // pred_check
        %p230 = pneg %p118
      $region22: #{conv_block_forward.1} parent=11 // pred_check_branch
        %232 = sbr.rel (%p230) target = $region24
      $region23: #{conv_block_forward.1} parent=11 // pred_region
        _
      $region24: #{conv_block_forward.1} parent=11 // pred_fallthru
        _
      // Predicated region
      $region25: #{conv_block_forward.1} parent=11 // pred_check
        %p233 = pneg %p139
      $region26: #{conv_block_forward.1} parent=11 // pred_check_branch
        %235 = sbr.rel (%p233) target = $region28
      $region27: #{conv_block_forward.1} parent=11 // pred_region
        _
      $region28: #{conv_block_forward.1} parent=11 // pred_fallthru
        _
      // Predicated region
      $region29: #{conv_block_forward.1} parent=11 // pred_check
        %p236 = pneg %p160
      $region30: #{conv_block_forward.1} parent=11 // pred_check_branch
        %238 = sbr.rel (%p236) target = $region32
      $region31: #{conv_block_forward.1} parent=11 // pred_region
        _
      $region32: #{conv_block_forward.1} parent=11 // pred_fallthru
        _
      // Predicated region
      $region33: #{conv_block_forward.1} parent=11 // pred_check
        %p239 = pneg %p181
      $region34: #{conv_block_forward.1} parent=11 // pred_check_branch
        %241 = sbr.rel (%p239) target = $region36
      $region35: #{conv_block_forward.1} parent=11 // pred_region
        _
      $region36: #{conv_block_forward.1} parent=11 // pred_fallthru
        _
    $region12: #{conv_block_forward.1} parent=5 // pred_fallthru
      _
    %p242 = scmp.lt.s32.totalorder %s13, 4
    // Predicated region
    $region37: #{conv_block_forward.1} parent=5 // pred_check
      %p243 = pneg %p242
    $region38: #{conv_block_forward.1} parent=5 // pred_check_branch
      %245 = sbr.rel (%p243) target = $region40
    $region39: #{conv_block_forward.1} parent=5 // pred_region
      // Predicated region
      $region41: #{conv_block_forward.1} parent=39 // pred_check
        %p246 = pneg %p49
      $region42: #{conv_block_forward.1} parent=39 // pred_check_branch
        %248 = sbr.rel (%p246) target = $region44
      $region43: #{conv_block_forward.1} parent=39 // pred_region
        %s249 = ssub.s32 1, %s20
        %s250 = smul.u32 %s21, %s249
        %p251 = scmp.lt.s32.totalorder %s250, 1
        %s252 = scalar_select %p251, %s250, 1
        %s253 = smul.addr %s252, 2
        %s254 = smul.addr %s253, 4
        %s255 = scalar_lea.vmem %s0, %s254
        %s256 = ssub.s32 1, %s20
        %s257 = smul.u32 %s21, %s256
      $region44: #{conv_block_forward.1} parent=39 // pred_fallthru
        _
    $region40: #{conv_block_forward.1} parent=5 // pred_fallthru
      _
    %p258 = scmp.le.s32.totalorder 1, %s13
    %p259 = scmp.lt.s32.totalorder %s13, 5
    %p260 = pnand %p258, %p259
    %p261 = pneg %p260
    // Predicated region
    $region45: #{conv_block_forward.1} parent=5 // pred_check
      _
    $region46: #{conv_block_forward.1} parent=5 // pred_check_branch
      %263 = sbr.rel (%p260) target = $region48
    $region47: #{conv_block_forward.1} parent=5 // pred_region
      %s264 = ssub.s32 %s13, 1
      %s265 = ssub.s32 1, %s22
      %s266 = smul.u32 %s23, %s265
      %p267 = scmp.lt.s32.totalorder %s266, 1
      %s268 = scalar_select %p267, %s266, 1
      %s269 = smul.addr %s268, 2
      %s270 = smul.addr %s269, 4
      %s271 = scalar_lea.vmem %s0, %s270
      %p272 = pneg %p55
      %p273 = pneg %p52
      %p274 = pneg %p76
      %p275 = pneg %p73
      %p276 = pneg %p97
      %p277 = pneg %p94
      %p278 = pneg %p118
      %p279 = pneg %p115
      %p280 = pneg %p139
      %p281 = pneg %p136
      %p282 = pneg %p160
      %p283 = pneg %p157
      %p284 = pneg %p181
      %p285 = pneg %p178
      %p286 = pneg %p209
      %p287 = pneg %p206
      %s288 = smul.u32 %s22, %s23
      %p289 = scmp.lt.s32.totalorder %s288, 1
      %s290 = scalar_select %p289, %s288, 1
      %s291 = smul.addr %s290, 2
      %s292 = smul.addr %s291, 8
      %s293 = scalar_lea.vmem %s7, %s292
      %s294 = ssub.s32 1, %s22
      %s295 = smul.u32 %s23, %s294
      %p296 = scmp.lt.s32.totalorder %s295, 1
      %s297 = scalar_select %p296, %s295, 1
      %s298 = smul.addr %s297, 2
      %s299 = smul.addr %s298, 4
      %s300 = scalar_lea.vmem %s0, %s299
      %s301 = ssub.s32 1, %s22
      %s302 = smul.u32 %s23, %s301
      %s303 = smul.u32 %s22, %s23
      %p304 = scmp.lt.s32.totalorder %s303, 1
      %s305 = scalar_select %p304, %s303, 1
      %s306 = smul.addr %s305, 2
      %s307 = smul.addr %s306, 8
      %s308 = scalar_lea.vmem %s7, %s307
      %s309 = smul.u32 %s22, %s23
      %p311 = scmp.eq.s32.totalorder %s22, 0
      %p312 = scmp.eq.s32.totalorder %s23, 0
      %p313 = pnand %p311, %p312
      %p314 = pneg %p313
      // Predicated region
      $region49: #{conv_block_forward.1} parent=47 // pred_check
        _
      $region50: #{conv_block_forward.1} parent=47 // pred_check_branch
        %316 = sbr.rel (%p313) target = $region52
      $region51: #{conv_block_forward.1} parent=47 // pred_region
        %317 = vst [vmem:[#allocation3] sm:$0x1] 0.0
        %318 = vst [vmem:[#allocation4] sm:$0x1] 0.0
      $region52: #{conv_block_forward.1} parent=47 // pred_fallthru
        _
      // Predicated region
      $region53: #{conv_block_forward.1} parent=47 // pred_check
        %p319 = pneg %p311
      $region54: #{conv_block_forward.1} parent=47 // pred_check_branch
        %321 = sbr.rel (%p319) target = $region56
      $region55: #{conv_block_forward.1} parent=47 // pred_region
        %v322 = vld [vmem:[%s300] sm:$0xf]
        %v323 = vld [vmem:[%s300 + $0x4] sm:$0xf]
        %v324 = vld [vmem:[%s1] sm:$0xf]
        %v325 = vld [vmem:[%s1 + $0x4] sm:$0xf]
        %v326 = vld [vmem:[%s1 + $0x8] sm:$0xf]
        %v327 = vld [vmem:[%s1 + $0xc] sm:$0xf]
        %v328 = vld [vmem:[%s1 + $0x10] sm:$0xf]
        %v329 = vld [vmem:[%s1 + $0x14] sm:$0xf]
        %v330 = vld [vmem:[%s1 + $0x18] sm:$0xf]
        %v331 = vld [vmem:[%s1 + $0x1c] sm:$0xf]
        %v334 = vunpack.c.l.b16 %v322
        %v335 = vunpack.c.l.b16 %v323
        %v336 = vpack.c.b16 %v335, %v334
        %v345 = vunpack.c.l.b16 %v324
        %v346 = vunpack.c.l.b16 %v325
        %v347 = vunpack.c.l.b16 %v326
        %v348 = vunpack.c.l.b16 %v327
        %v349 = vunpack.c.l.b16 %v328
        %v350 = vunpack.c.l.b16 %v329
        %v351 = vunpack.c.l.b16 %v330
        %v352 = vunpack.c.l.b16 %v331
        %v353 = vpack.c.b16 %v346, %v345
        %v354 = vpack.c.b16 %v348, %v347
        %v355 = vpack.c.b16 %v350, %v349
        %v356 = vpack.c.b16 %v352, %v351
        %vm361 = vcmask 523264
        %v363 = vsel %vm361, %v336, 0
        %365 = vmatprep.subr.bf16.mxu0 0
        %366 = vmatpush1.bf16.msra.mxu0 %v353
        %367 = vmatprep.subr.bf16.mxu0 0
        %368 = vmatpush1.bf16.msra.mxu0 %v354
        %369 = vmatprep.subr.bf16.mxu0 0
        %370 = vmatpush1.bf16.msra.mxu0 %v355
        %371 = vmatprep.subr.bf16.mxu0 0
        %372 = vmatpush1.bf16.msra.mxu0 %v356
        %373 = vmatprep.subr.bf16.mxu0 0
        %374 = vmatpush1.bf16.msra.mxu0 0
        %375 = vmatprep.subr.bf16.mxu0 0
        %376 = vmatpush1.bf16.msra.mxu0 0
        %377 = vmatprep.subr.bf16.mxu0 0
        %378 = vmatpush1.bf16.msra.mxu0 0
        %379 = vmatprep.subr.bf16.mxu0 0
        %380 = vmatpush1.bf16.msra.mxu0 0
        %381 = vmatprep.subr.bf16.mxu0 0
        %382 = vmatpush1.bf16.msra.mxu0 0
        %383 = vmatprep.subr.bf16.mxu0 0
        %384 = vmatpush1.bf16.msra.mxu0 0
        %385 = vmatprep.subr.bf16.mxu0 0
        %386 = vmatpush1.bf16.msra.mxu0 0
        %387 = vmatprep.subr.bf16.mxu0 0
        %388 = vmatpush1.bf16.msra.mxu0 0
        %389 = vmatprep.subr.bf16.mxu0 0
        %390 = vmatpush1.bf16.msra.mxu0 0
        %391 = vmatprep.subr.bf16.mxu0 0
        %392 = vmatpush1.bf16.msra.mxu0 0
        %393 = vmatprep.subr.bf16.mxu0 0
        %394 = vmatpush1.bf16.msra.mxu0 0
        %395 = vmatprep.subr.bf16.mxu0 0
        %396 = vmatpush1.bf16.msra.mxu0 0
        %397 = vmatprep.mubr.bf16.mxu0 0
        %398 = vmatmul.mubr.bf16.gmra.mrb[0].mxu0 %v363
        %v399 = vpop.f32.mrb[0].mxu0
        %v400 = vadd.f32 0.0, %v399
        %v401 = vpop.f32.mrb[0].mxu0
        %v402 = vpop.f32.mrb[0].mxu0
        %v403 = vadd.f32 0.0, %v402
        %v404 = vpop.f32.mrb[0].mxu0
        %405 = vdwg.mxu0
        %s406 = smul.u32 %s23, 16
        %s407 = scalar_lea.vmem [#allocation2], %s406
        %408 = vst [vmem:[%s407] sm:$0xff] %v400
        %409 = vst [vmem:[%s407 + $0x8] sm:$0xff] %v403
        %v410 = vld [vmem:[#allocation3] sm:$0x1]
        %v411 = vadd.f32 %v400, %v403
        %v412 = vrot.slane %v411, 4
        %v413 = vadd.f32 %v411, %v412
        %v414 = vrot.slane %v413, 2
        %v415 = vadd.f32 %v413, %v414
        %v416 = vrot.slane %v415, 1
        %v417 = vadd.f32 %v415, %v416
        %v418 = vadd.f32 %v410, %v417
        %419 = vst [vmem:[#allocation3] sm:$0x1] %v418
        %v420 = vld [vmem:[#allocation4] sm:$0x1]
        %v421 = vmul.f32 %v400, %v400
        %v422 = vmul.f32 %v403, %v403
        %v423 = vadd.f32 %v421, %v422
        %v424 = vrot.slane %v423, 4
        %v425 = vadd.f32 %v423, %v424
        %v426 = vrot.slane %v425, 2
        %v427 = vadd.f32 %v425, %v426
        %v428 = vrot.slane %v427, 1
        %v429 = vadd.f32 %v427, %v428
        %v430 = vadd.f32 %v420, %v429
        %431 = vst [vmem:[#allocation4] sm:$0x1] %v430
      $region56: #{conv_block_forward.1} parent=47 // pred_fallthru
        _
      %p432 = scmp.eq.s32.totalorder %s22, 1
      %p433 = pnand %p432, %p312
      %p434 = pneg %p433
      // Predicated region
      $region57: #{conv_block_forward.1} parent=47 // pred_check
        _
      $region58: #{conv_block_forward.1} parent=47 // pred_check_branch
        %436 = sbr.rel (%p433) target = $region60
      $region59: #{conv_block_forward.1} parent=47 // pred_region
        %v437 = vld [vmem:[#allocation3] sm:$0x1]
        %v438 = vld [vmem:[%s2] sm:$0xff]
        %v439 = vld [vmem:[%s2 + $0x8] sm:$0xff]
        %v440 = vld [vmem:[%s2 + $0x10] sm:$0xff]
        %v441 = vld [vmem:[%s2 + $0x18] sm:$0xff]
        %v442 = vld [vmem:[%s2 + $0x20] sm:$0xff]
        %v443 = vld [vmem:[%s2 + $0x28] sm:$0xff]
        %v444 = vld [vmem:[%s2 + $0x30] sm:$0xff]
        %v445 = vld [vmem:[%s2 + $0x38] sm:$0xff]
        %v446 = vld [vmem:[%s2 + $0x40] sm:$0xff]
        %v447 = vld [vmem:[%s2 + $0x48] sm:$0xff]
        %v448 = vld [vmem:[%s2 + $0x50] sm:$0xff]
        %v449 = vld [vmem:[%s2 + $0x58] sm:$0xff]
        %v450 = vld [vmem:[%s2 + $0x60] sm:$0xff]
        %v451 = vld [vmem:[%s2 + $0x68] sm:$0xff]
        %v452 = vld [vmem:[%s2 + $0x70] sm:$0xff]
        %v453 = vld [vmem:[%s2 + $0x78] sm:$0xff]
        %454 = vmatprep.subr.mxu0 0.0
        %455 = vmatpush1.msra.mxu0 %v438
        %456 = vmatprep.subr.mxu0 0.0
        %457 = vmatpush1.msra.mxu0 %v439
        %458 = vmatprep.subr.mxu0 0.0
        %459 = vmatpush1.msra.mxu0 %v440
        %460 = vmatprep.subr.mxu0 0.0
        %461 = vmatpush1.msra.mxu0 %v441
        %462 = vmatprep.subr.mxu0 0.0
        %463 = vmatpush1.msra.mxu0 %v442
        %464 = vmatprep.subr.mxu0 0.0
        %465 = vmatpush1.msra.mxu0 %v443
        %466 = vmatprep.subr.mxu0 0.0
        %467 = vmatpush1.msra.mxu0 %v444
        %468 = vmatprep.subr.mxu0 0.0
        %469 = vmatpush1.msra.mxu0 %v445
        %470 = vmatprep.subr.mxu0 0.0
        %471 = vmatpush1.msra.mxu0 %v446
        %472 = vmatprep.subr.mxu0 0.0
        %473 = vmatpush1.msra.mxu0 %v447
        %474 = vmatprep.subr.mxu0 0.0
        %475 = vmatpush1.msra.mxu0 %v448
        %476 = vmatprep.subr.mxu0 0.0
        %477 = vmatpush1.msra.mxu0 %v449
        %478 = vmatprep.subr.mxu0 0.0
        %479 = vmatpush1.msra.mxu0 %v450
        %480 = vmatprep.subr.mxu0 0.0
        %481 = vmatpush1.msra.mxu0 %v451
        %482 = vmatprep.subr.mxu0 0.0
        %483 = vmatpush1.msra.mxu0 %v452
        %484 = vmatprep.subr.mxu0 0.0
        %485 = vmatpush1.msra.mxu0 %v453
        %486 = vmatprep.subr.mxu0 0.0
        %487 = vmatpush1.msra.mxu0 0.0
        %488 = vmatprep.subr.mxu0 0.0
        %489 = vmatpush1.msra.mxu0 0.0
        %490 = vmatprep.subr.mxu0 0.0
        %491 = vmatpush1.msra.mxu0 0.0
        %492 = vmatprep.subr.mxu0 0.0
        %493 = vmatpush1.msra.mxu0 0.0
        %494 = vmatprep.subr.mxu0 0.0
        %495 = vmatpush1.msra.mxu0 0.0
        %496 = vmatprep.subr.mxu0 0.0
        %497 = vmatpush1.msra.mxu0 0.0
        %498 = vmatprep.subr.mxu0 0.0
        %499 = vmatpush1.msra.mxu0 0.0
        %500 = vmatprep.subr.mxu0 0.0
        %501 = vmatpush1.msra.mxu0 0.0
        %502 = vmatprep.subr.mxu0 0.0
        %503 = vmatpush1.msra.mxu0 0.0
        %504 = vmatprep.subr.mxu0 0.0
        %505 = vmatpush1.msra.mxu0 0.0
        %506 = vmatprep.subr.mxu0 0.0
        %507 = vmatpush1.msra.mxu0 0.0
        %508 = vmatprep.subr.mxu0 0.0
        %509 = vmatpush1.msra.mxu0 0.0
        %510 = vmatprep.subr.mxu0 0.0
        %511 = vmatpush1.msra.mxu0 0.0
        %512 = vmatprep.subr.mxu0 0.0
        %513 = vmatpush1.msra.mxu0 0.0
        %514 = vmatprep.subr.mxu0 0.0
        %515 = vmatpush1.msra.mxu0 0.0
        %516 = vmatprep.subr.mxu0 0.0
        %517 = vmatpush1.msra.mxu0 0.0
        %518 = vmatprep.mubr.f32.mxu0 0.0
        %519 = vmatmul.mubr.f32.gmra.mrb[0].mxu0 %v437
        %v520 = vpop.f32.mrb[0].mxu0
        %v521 = vadd.f32 0.0, %v520
        %v522 = vpop.f32.mrb[0].mxu0
        %523 = vdwg.mxu0
        %v524 = vld [vmem:[#allocation4] sm:$0x1]
        %525 = vmatprep.subr.mxu0 0.0
        %526 = vmatpush1.msra.mxu0 %v438
        %527 = vmatprep.subr.mxu0 0.0
        %528 = vmatpush1.msra.mxu0 %v439
        %529 = vmatprep.subr.mxu0 0.0
        %530 = vmatpush1.msra.mxu0 %v440
        %531 = vmatprep.subr.mxu0 0.0
        %532 = vmatpush1.msra.mxu0 %v441
        %533 = vmatprep.subr.mxu0 0.0
        %534 = vmatpush1.msra.mxu0 %v442
        %535 = vmatprep.subr.mxu0 0.0
        %536 = vmatpush1.msra.mxu0 %v443
        %537 = vmatprep.subr.mxu0 0.0
        %538 = vmatpush1.msra.mxu0 %v444
        %539 = vmatprep.subr.mxu0 0.0
        %540 = vmatpush1.msra.mxu0 %v445
        %541 = vmatprep.subr.mxu0 0.0
        %542 = vmatpush1.msra.mxu0 %v446
        %543 = vmatprep.subr.mxu0 0.0
        %544 = vmatpush1.msra.mxu0 %v447
        %545 = vmatprep.subr.mxu0 0.0
        %546 = vmatpush1.msra.mxu0 %v448
        %547 = vmatprep.subr.mxu0 0.0
        %548 = vmatpush1.msra.mxu0 %v449
        %549 = vmatprep.subr.mxu0 0.0
        %550 = vmatpush1.msra.mxu0 %v450
        %551 = vmatprep.subr.mxu0 0.0
        %552 = vmatpush1.msra.mxu0 %v451
        %553 = vmatprep.subr.mxu0 0.0
        %554 = vmatpush1.msra.mxu0 %v452
        %555 = vmatprep.subr.mxu0 0.0
        %556 = vmatpush1.msra.mxu0 %v453
        %557 = vmatprep.subr.mxu0 0.0
        %558 = vmatpush1.msra.mxu0 0.0
        %559 = vmatprep.subr.mxu0 0.0
        %560 = vmatpush1.msra.mxu0 0.0
        %561 = vmatprep.subr.mxu0 0.0
        %562 = vmatpush1.msra.mxu0 0.0
        %563 = vmatprep.subr.mxu0 0.0
        %564 = vmatpush1.msra.mxu0 0.0
        %565 = vmatprep.subr.mxu0 0.0
        %566 = vmatpush1.msra.mxu0 0.0
        %567 = vmatprep.subr.mxu0 0.0
        %568 = vmatpush1.msra.mxu0 0.0
        %569 = vmatprep.subr.mxu0 0.0
        %570 = vmatpush1.msra.mxu0 0.0
        %571 = vmatprep.subr.mxu0 0.0
        %572 = vmatpush1.msra.mxu0 0.0
        %573 = vmatprep.subr.mxu0 0.0
        %574 = vmatpush1.msra.mxu0 0.0
        %575 = vmatprep.subr.mxu0 0.0
        %576 = vmatpush1.msra.mxu0 0.0
        %577 = vmatprep.subr.mxu0 0.0
        %578 = vmatpush1.msra.mxu0 0.0
        %579 = vmatprep.subr.mxu0 0.0
        %580 = vmatpush1.msra.mxu0 0.0
        %581 = vmatprep.subr.mxu0 0.0
        %582 = vmatpush1.msra.mxu0 0.0
        %583 = vmatprep.subr.mxu0 0.0
        %584 = vmatpush1.msra.mxu0 0.0
        %585 = vmatprep.subr.mxu0 0.0
        %586 = vmatpush1.msra.mxu0 0.0
        %587 = vmatprep.subr.mxu0 0.0
        %588 = vmatpush1.msra.mxu0 0.0
        %589 = vmatprep.mubr.f32.mxu0 0.0
        %590 = vmatmul.mubr.f32.gmra.mrb[0].mxu0 %v524
        %v591 = vpop.f32.mrb[0].mxu0
        %v592 = vadd.f32 0.0, %v591
        %v593 = vpop.f32.mrb[0].mxu0
        %594 = vdwg.mxu0
        %v595 = vld [vmem:[%s3] sm:$0xff]
        %vm596 = vcmask 64512
        %v598 = vsel %vm596, %v521, 0
        %600 = vmatprep.subr.mxu0 0.0
        %601 = vmatpush1.msra.mxu0 %v595
        %602 = vmatprep.subr.mxu0 0.0
        %603 = vmatpush1.msra.mxu0 0.0
        %604 = vmatprep.subr.mxu0 0.0
        %605 = vmatpush1.msra.mxu0 0.0
        %606 = vmatprep.subr.mxu0 0.0
        %607 = vmatpush1.msra.mxu0 0.0
        %608 = vmatprep.subr.mxu0 0.0
        %609 = vmatpush1.msra.mxu0 0.0
        %610 = vmatprep.subr.mxu0 0.0
        %611 = vmatpush1.msra.mxu0 0.0
        %612 = vmatprep.subr.mxu0 0.0
        %613 = vmatpush1.msra.mxu0 0.0
        %614 = vmatprep.subr.mxu0 0.0
        %615 = vmatpush1.msra.mxu0 0.0
        %616 = vmatprep.subr.mxu0 0.0
        %617 = vmatpush1.msra.mxu0 0.0
        %618 = vmatprep.subr.mxu0 0.0
        %619 = vmatpush1.msra.mxu0 0.0
        %620 = vmatprep.subr.mxu0 0.0
        %621 = vmatpush1.msra.mxu0 0.0
        %622 = vmatprep.subr.mxu0 0.0
        %623 = vmatpush1.msra.mxu0 0.0
        %624 = vmatprep.subr.mxu0 0.0
        %625 = vmatpush1.msra.mxu0 0.0
        %626 = vmatprep.subr.mxu0 0.0
        %627 = vmatpush1.msra.mxu0 0.0
        %628 = vmatprep.subr.mxu0 0.0
        %629 = vmatpush1.msra.mxu0 0.0
        %630 = vmatprep.subr.mxu0 0.0
        %631 = vmatpush1.msra.mxu0 0.0
        %632 = vmatprep.subr.mxu0 0.0
        %633 = vmatpush1.msra.mxu0 0.0
        %634 = vmatprep.subr.mxu0 0.0
        %635 = vmatpush1.msra.mxu0 0.0
        %636 = vmatprep.subr.mxu0 0.0
        %637 = vmatpush1.msra.mxu0 0.0
        %638 = vmatprep.subr.mxu0 0.0
        %639 = vmatpush1.msra.mxu0 0.0
        %640 = vmatprep.subr.mxu0 0.0
        %641 = vmatpush1.msra.mxu0 0.0
        %642 = vmatprep.subr.mxu0 0.0
        %643 = vmatpush1.msra.mxu0 0.0
        %644 = vmatprep.subr.mxu0 0.0
        %645 = vmatpush1.msra.mxu0 0.0
        %646 = vmatprep.subr.mxu0 0.0
        %647 = vmatpush1.msra.mxu0 0.0
        %648 = vmatprep.subr.mxu0 0.0
        %649 = vmatpush1.msra.mxu0 0.0
        %650 = vmatprep.subr.mxu0 0.0
        %651 = vmatpush1.msra.mxu0 0.0
        %652 = vmatprep.subr.mxu0 0.0
        %653 = vmatpush1.msra.mxu0 0.0
        %654 = vmatprep.subr.mxu0 0.0
        %655 = vmatpush1.msra.mxu0 0.0
        %656 = vmatprep.subr.mxu0 0.0
        %657 = vmatpush1.msra.mxu0 0.0
        %658 = vmatprep.subr.mxu0 0.0
        %659 = vmatpush1.msra.mxu0 0.0
        %660 = vmatprep.subr.mxu0 0.0
        %661 = vmatpush1.msra.mxu0 0.0
        %662 = vmatprep.subr.mxu0 0.0
        %663 = vmatpush1.msra.mxu0 0.0
        %664 = vmatprep.mubr.f32.mxu0 0.0
        %665 = vmatmul.mubr.f32.gmra.mrb[0].mxu0 %v598
        %v666 = vpop.f32.mrb[0].mxu0
        %v667 = vadd.f32 0.0, %v666
        %v668 = vpop.f32.mrb[0].mxu0
        %669 = vdwg.mxu0
        %v670 = vmul.f32 %v667, 0.001953125
        %v672 = vsel %vm596, %v592, 0
        %674 = vmatprep.subr.mxu0 0.0
        %675 = vmatpush1.msra.mxu0 %v595
        %676 = vmatprep.subr.mxu0 0.0
        %677 = vmatpush1.msra.mxu0 0.0
        %678 = vmatprep.subr.mxu0 0.0
        %679 = vmatpush1.msra.mxu0 0.0
        %680 = vmatprep.subr.mxu0 0.0
        %681 = vmatpush1.msra.mxu0 0.0
        %682 = vmatprep.subr.mxu0 0.0
        %683 = vmatpush1.msra.mxu0 0.0
        %684 = vmatprep.subr.mxu0 0.0
        %685 = vmatpush1.msra.mxu0 0.0
        %686 = vmatprep.subr.mxu0 0.0
        %687 = vmatpush1.msra.mxu0 0.0
        %688 = vmatprep.subr.mxu0 0.0
        %689 = vmatpush1.msra.mxu0 0.0
        %690 = vmatprep.subr.mxu0 0.0
        %691 = vmatpush1.msra.mxu0 0.0
        %692 = vmatprep.subr.mxu0 0.0
        %693 = vmatpush1.msra.mxu0 0.0
        %694 = vmatprep.subr.mxu0 0.0
        %695 = vmatpush1.msra.mxu0 0.0
        %696 = vmatprep.subr.mxu0 0.0
        %697 = vmatpush1.msra.mxu0 0.0
        %698 = vmatprep.subr.mxu0 0.0
        %699 = vmatpush1.msra.mxu0 0.0
        %700 = vmatprep.subr.mxu0 0.0
        %701 = vmatpush1.msra.mxu0 0.0
        %702 = vmatprep.subr.mxu0 0.0
        %703 = vmatpush1.msra.mxu0 0.0
        %704 = vmatprep.subr.mxu0 0.0
        %705 = vmatpush1.msra.mxu0 0.0
        %706 = vmatprep.subr.mxu0 0.0
        %707 = vmatpush1.msra.mxu0 0.0
        %708 = vmatprep.subr.mxu0 0.0
        %709 = vmatpush1.msra.mxu0 0.0
        %710 = vmatprep.subr.mxu0 0.0
        %711 = vmatpush1.msra.mxu0 0.0
        %712 = vmatprep.subr.mxu0 0.0
        %713 = vmatpush1.msra.mxu0 0.0
        %714 = vmatprep.subr.mxu0 0.0
        %715 = vmatpush1.msra.mxu0 0.0
        %716 = vmatprep.subr.mxu0 0.0
        %717 = vmatpush1.msra.mxu0 0.0
        %718 = vmatprep.subr.mxu0 0.0
        %719 = vmatpush1.msra.mxu0 0.0
        %720 = vmatprep.subr.mxu0 0.0
        %721 = vmatpush1.msra.mxu0 0.0
        %722 = vmatprep.subr.mxu0 0.0
        %723 = vmatpush1.msra.mxu0 0.0
        %724 = vmatprep.subr.mxu0 0.0
        %725 = vmatpush1.msra.mxu0 0.0
        %726 = vmatprep.subr.mxu0 0.0
        %727 = vmatpush1.msra.mxu0 0.0
        %728 = vmatprep.subr.mxu0 0.0
        %729 = vmatpush1.msra.mxu0 0.0
        %730 = vmatprep.subr.mxu0 0.0
        %731 = vmatpush1.msra.mxu0 0.0
        %732 = vmatprep.subr.mxu0 0.0
        %733 = vmatpush1.msra.mxu0 0.0
        %734 = vmatprep.subr.mxu0 0.0
        %735 = vmatpush1.msra.mxu0 0.0
        %736 = vmatprep.subr.mxu0 0.0
        %737 = vmatpush1.msra.mxu0 0.0
        %738 = vmatprep.mubr.f32.mxu0 0.0
        %739 = vmatmul.mubr.f32.gmra.mrb[0].mxu0 %v672
        %v740 = vpop.f32.mrb[0].mxu0
        %v741 = vadd.f32 0.0, %v740
        %v742 = vpop.f32.mrb[0].mxu0
        %743 = vdwg.mxu0
        %v744 = vmul.f32 %v741, 0.001953125
        %v745 = vmul.f32 %v670, %v670
        %v746 = vsub.f32 %v744, %v745
        %v747 = vmax.f32 %v746, 0.0
        %v748 = vadd.f32 %v747, 1e-05
        %v749 = vrsqrt.pop %v748
        %v750 = vld [vmem:[%s4] sm:$0x1]
        %v751 = vmul.f32 %v750, %v749
        %752 = vst [vmem:[#allocation5] sm:$0x1] %v751
        %v753 = vld [vmem:[%s5] sm:$0x1]
        %v754 = vmul.f32 %v670, %v750
        %v755 = vmul.f32 %v754, %v749
        %v756 = vsub.f32 %v753, %v755
        %757 = vst [vmem:[#allocation6] sm:$0x1] %v756
      $region60: #{conv_block_forward.1} parent=47 // pred_fallthru
        _
      // Predicated region
      $region61: #{conv_block_forward.1} parent=47 // pred_check
        %p758 = pneg %p432
      $region62: #{conv_block_forward.1} parent=47 // pred_check_branch
        %760 = sbr.rel (%p758) target = $region64
      $region63: #{conv_block_forward.1} parent=47 // pred_region
        %s761 = smul.u32 %s23, 16
        %s762 = scalar_lea.vmem [#allocation2], %s761
        %v763 = vld [vmem:[%s762] sm:$0xff]
        %v764 = vld [vmem:[%s762 + $0x8] sm:$0xff]
        %v765 = vld [vmem:[#allocation5] sm:$0x1]
        %v767 = vlaneseq
        %v768 = vshrl.u32 %v767, 7
        %v769 = vsub.s32 0, %v768
        %v770 = vrot.slane %v765, %v769
        %v772 = vmul.f32 %v763, %v770
        %v773 = vmul.f32 %v764, %v770
        %v774 = vld [vmem:[#allocation6] sm:$0x1]
        %v776 = vlaneseq
        %v777 = vshrl.u32 %v776, 7
        %v778 = vsub.s32 0, %v777
        %v779 = vrot.slane %v774, %v778
        %v781 = vadd.f32 %v772, %v779
        %v782 = vadd.f32 %v773, %v779
        %vm783 = vcmp.ge.f32.partialorder %v781, 0.0
        %vm784 = vcmp.ge.f32.partialorder %v782, 0.0
        %v785 = vld [vmem:[%s6] sm:$0x1]
        %v787 = vlaneseq
        %v788 = vshrl.u32 %v787, 7
        %v789 = vsub.s32 0, %v788
        %v790 = vrot.slane %v785, %v789
        %v792 = vmul.f32 %v790, %v781
        %v793 = vmul.f32 %v790, %v782
        %v794 = vsel %vm783, %v781, %v792
        %v795 = vsel %vm784, %v782, %v793
        %796 = vst [vmem:[%s308] sm:$0xff] %v794
        %797 = vst [vmem:[%s308 + $0x8] sm:$0xff] %v795
      $region64: #{conv_block_forward.1} parent=47 // pred_fallthru
        _
      %s798 = smul.u32 %s22, %s23
      %p799 = scmp.lt.s32.totalorder %s798, 1
      %s800 = scalar_select %p799, %s798, 1
      %s801 = smul.addr %s800, 2
      %s802 = smul.addr %s801, 8
      %s803 = scalar_lea.vmem %s7, %s802
      // Predicated region
      $region65: #{conv_block_forward.1} parent=47 // pred_check
        %p804 = pneg %p206
      $region66: #{conv_block_forward.1} parent=47 // pred_check_branch
        %806 = sbr.rel (%p804) target = $region68
      $region67: #{conv_block_forward.1} parent=47 // pred_region
        %s807 = smul.u32 %s22, %s23
      $region68: #{conv_block_forward.1} parent=47 // pred_fallthru
        _
    $region48: #{conv_block_forward.1} parent=5 // pred_fallthru
      _
    %p808 = scmp.le.s32.totalorder 2, %s13
    // Predicated region
    $region69: #{conv_block_forward.1} parent=5 // pred_check
      %p809 = pneg %p808
    $region70: #{conv_block_forward.1} parent=5 // pred_check_branch
      %811 = sbr.rel (%p809) target = $region72
    $region71: #{conv_block_forward.1} parent=5 // pred_region
      %s812 = ssub.s32 %s13, 2
      // Predicated region
      $region73: #{conv_block_forward.1} parent=71 // pred_check
        %p813 = pneg %p212
      $region74: #{conv_block_forward.1} parent=71 // pred_check_branch
        %815 = sbr.rel (%p813) target = $region76
      $region75: #{conv_block_forward.1} parent=71 // pred_region
        %s816 = smul.u32 %s24, %s25
        %p817 = scmp.lt.s32.totalorder %s816, 1
        %s818 = scalar_select %p817, %s816, 1
        %s819 = smul.addr %s818, 2
        %s820 = smul.addr %s819, 8
        %s821 = scalar_lea.vmem %s7, %s820
      $region76: #{conv_block_forward.1} parent=71 // pred_fallthru
        _
    $region72: #{conv_block_forward.1} parent=5 // pred_fallthru
      _
  $region6: #{conv_block_forward.1} parent=0 // loop_footer
    %s17 = sadd.s32 1, %s13
  $region7: #{conv_block_forward.1} parent=0 // loop_footer_branch
    %12 = sbr.rel target = $region3
  $region8: #{conv_block_forward.1} parent=0 // loop_exit
    _

</llo_original>
